<compile_context>
chip_gen: v6e
topology: v6e:2x2x1
jax: 0.10.0
libtpu: 0.0.40
codegen_flags: <defaults>
</compile_context>

<pallas_src>
import functools

import jax
import jax.numpy as jnp
from jax.experimental import pallas as pl
from jax.experimental.pallas import tpu as pltpu

LANE = 128        # lane width: H / vocab padding granularity
SUBLANE = 8       # sublane width: T padding granularity (review: 8, not 128)
TILE_V = 512      # vocab tile streamed per grid step (keep a multiple of 256)
NEG_INF = -1e30


def _round_up(x, m):
    return (x + m - 1) // m * m


# ---------------------------------------------------------------------------
# Kernel A: attention + GRU cell (single invocation per decode step)
# ---------------------------------------------------------------------------
def attn_gru_kernel(T, emb_ref, h_ref, enc_ref, ee_ref,
                    attn_wh_ref, v_ref,
                    w_ih_e_ref, w_ih_c_ref, b_ih_ref, w_hh_ref, b_hh_ref,
                    hnew_ref, hc_ref, attn_ref):
    B, Tp, Hp = enc_ref.shape
    h = h_ref[...]                                       # (B, Hp)
    emb = emb_ref[...]                                   # (B, E)
    enc = enc_ref[...]                                   # (B, Tp, Hp)

    # ---- attention: tanh(enc@W_e + b + h@W_h); enc@W_e + b precomputed (ee)
    e_h = jnp.dot(h, attn_wh_ref[...], preferred_element_type=jnp.float32)
    energy = jnp.tanh(ee_ref[...] + e_h[:, None, :])     # (B, Tp, Hp)
    # scores = v . energy  (VPU mul + lane reduce; no transpose / 1-wide matmul)
    scores = jnp.sum(energy * v_ref[...], axis=-1)       # (B, Tp)
    if Tp > T:                                           # static: only if padded
        t_idx = jax.lax.broadcasted_iota(jnp.int32, (B, Tp), 1)
        scores = jnp.where(t_idx < T, scores, NEG_INF)
    mx = jnp.max(scores, axis=-1, keepdims=True)
    ex = jnp.exp(scores - mx)
    attn = ex * pl.reciprocal(jnp.sum(ex, axis=-1, keepdims=True), approx=True)
    attn_ref[...] = attn                                 # (B, Tp)

    # context = attn @ enc
    ctx = jnp.sum(attn[:, :, None] * enc, axis=1)        # (B, Hp)

    # ---- GRU cell (gate order [r, z, n]); split input weights (no concat)
    gi = (jnp.dot(emb, w_ih_e_ref[...], preferred_element_type=jnp.float32)
          + jnp.dot(ctx, w_ih_c_ref[...], preferred_element_type=jnp.float32)
          + b_ih_ref[...])                               # (B, 3Hp)
    gh = (jnp.dot(h, w_hh_ref[...], preferred_element_type=jnp.float32)
          + b_hh_ref[...])                               # (B, 3Hp)
    i_r, i_z, i_n = gi[:, :Hp], gi[:, Hp:2 * Hp], gi[:, 2 * Hp:]
    h_r, h_z, h_n = gh[:, :Hp], gh[:, Hp:2 * Hp], gh[:, 2 * Hp:]
    r = jax.nn.sigmoid(i_r + h_r)
    z = jax.nn.sigmoid(i_z + h_z)
    n = jnp.tanh(i_n + r * h_n)
    hnew = (1.0 - z) * n + z * h
    hnew_ref[...] = hnew                                 # f32 recurrent state

    # fused projection operand: bf16 [h_new, ctx] (lane-aligned halves)
    hc_ref[:, :Hp] = hnew.astype(hc_ref.dtype)
    hc_ref[:, Hp:] = ctx.astype(hc_ref.dtype)


# ---------------------------------------------------------------------------
# Kernel B: output projection, one vocab tile per grid step ("parallel" axis)
# ---------------------------------------------------------------------------
def proj_kernel(hc_ref, out_w_ref, out_b_ref, logits_ref):
    # bf16 x bf16 -> f32 accumulate; vocab mask already baked into out_b.
    logits_ref[...] = (
        jnp.dot(hc_ref[...], out_w_ref[...], preferred_element_type=jnp.float32)
        + out_b_ref[...])


# ---------------------------------------------------------------------------
# pallas_call wrappers
# ---------------------------------------------------------------------------
def _attn_gru_call(pp, emb, h_p, enc_p, ee_p, *, T):
    B, E = emb.shape
    _, Tp, Hp = enc_p.shape

    def full(shape):
        return pl.BlockSpec(shape, lambda i, _s=shape: (0,) * len(_s))

    grid_spec = pltpu.PrefetchScalarGridSpec(
        num_scalar_prefetch=0,
        grid=(1,),
        in_specs=[
            full((B, E)),                 # emb
            full((B, Hp)),                # h_prev (padded)
            full((B, Tp, Hp)),            # enc (padded)
            full((B, Tp, Hp)),            # ee = enc @ W_e + b (precomputed)
            full((Hp, Hp)),               # attn_wh
            full((1, Hp)),                # v
            full((E, 3 * Hp)),            # w_ih_e
            full((Hp, 3 * Hp)),           # w_ih_c
            full((1, 3 * Hp)),            # b_ih
            full((Hp, 3 * Hp)),           # w_hh
            full((1, 3 * Hp)),            # b_hh
        ],
        out_specs=(
            full((B, Hp)),                # new hidden (f32)
            full((B, 2 * Hp)),            # stacked [h_new, ctx] (bf16)
            full((B, Tp)),                # attention weights
        ),
    )
    return pl.pallas_call(
        functools.partial(attn_gru_kernel, T),
        out_shape=(
            jax.ShapeDtypeStruct((B, Hp), jnp.float32),
            jax.ShapeDtypeStruct((B, 2 * Hp), jnp.bfloat16),
            jax.ShapeDtypeStruct((B, Tp), jnp.float32),
        ),
        grid_spec=grid_spec,
        compiler_params=pltpu.CompilerParams(
            dimension_semantics=("arbitrary",),
            vmem_limit_bytes=32 * 1024 * 1024),
    )(emb, h_p, enc_p, ee_p,
      pp["attn_wh"], pp["v"],
      pp["w_ih_e"], pp["w_ih_c"], pp["b_ih"], pp["w_hh"], pp["b_hh"])


def _projection_call(pp, hc, *, tile_v=TILE_V):
    B, H2p = hc.shape
    Vp = pp["out_w"].shape[1]
    assert Vp % tile_v == 0
    nv = Vp // tile_v

    grid_spec = pltpu.PrefetchScalarGridSpec(
        num_scalar_prefetch=0,
        grid=(nv,),
        in_specs=[
            pl.BlockSpec((B, H2p), lambda i: (0, 0)),       # hc (resident, tiny)
            pl.BlockSpec((H2p, tile_v), lambda i: (0, i)),  # bf16 weight tile (streamed)
            pl.BlockSpec((1, tile_v), lambda i: (0, i)),    # bias tile (mask baked in)
        ],
        out_specs=pl.BlockSpec((B, tile_v), lambda i: (0, i)),  # streamed writeback
    )
    return pl.pallas_call(
        proj_kernel,
        out_shape=jax.ShapeDtypeStruct((B, Vp), jnp.float32),
        grid_spec=grid_spec,
        compiler_params=pltpu.CompilerParams(
            # tiles are fully independent -> v7x splits the vocab across both TCs
            dimension_semantics=("parallel",),
            vmem_limit_bytes=32 * 1024 * 1024),
    )(hc, pp["out_w"], pp["out_b"])


def decode_step_padded(pp, emb, h_p, enc_p, ee_p, *, T, tile_v=TILE_V):
    """One decode step on pre-padded operands.  Returns
    (raw logits (B,Vp), new hidden (B,Hp), attention weights (B,Tp))."""
    hnew_p, hc, attn_p = _attn_gru_call(pp, emb, h_p, enc_p, ee_p, T=T)
    logits_p = _projection_call(pp, hc, tile_v=tile_v)
    return logits_p, hnew_p, attn_p


# ---------------------------------------------------------------------------
# Parameter init (unpadded, PyTorch-equivalent) and one-time prep
# ---------------------------------------------------------------------------
def init_params(key, embed_size, hidden_size, output_size):
    ks = jax.random.split(key, 10)
    H, E, V = hidden_size, embed_size, output_size

    def unif(k, shape, bound):
        return jax.random.uniform(k, shape, jnp.float32, -bound, bound)

    sH = 1.0 / jnp.sqrt(jnp.float32(H))
    s2H = 1.0 / jnp.sqrt(jnp.float32(2 * H))
    return {
        "embed":  jax.random.normal(ks[0], (V, E), jnp.float32),
        "attn_w": unif(ks[1], (2 * H, H), s2H),     # Linear(2H->H), stored (in,out)
        "attn_b": unif(ks[2], (1, H), s2H),
        "v":      unif(ks[3], (1, H), sH),
        "w_ih":   unif(ks[4], (E + H, 3 * H), sH),  # GRU, gate order [r,z,n]
        "b_ih":   unif(ks[5], (1, 3 * H), sH),
        "w_hh":   unif(ks[6], (H, 3 * H), sH),
        "b_hh":   unif(ks[7], (1, 3 * H), sH),
        "out_w":  unif(ks[8], (2 * H, V), s2H),     # Linear(2H->V), stored (in,out)
        "out_b":  unif(ks[9], (1, V), s2H),
    }


def prepare_params(params, embed_size, hidden_size, output_size, tile_v=TILE_V):
    """One-time prep (hoisted outside the decode loop): split concat-style
    weights, pad feature dims, stack + bf16-quantize the streamed projection
    weight, and bake the vocab mask into the padded bias."""
    E, H, V = embed_size, hidden_size, output_size
    Hp = _round_up(H, LANE)
    Vp = _round_up(V, tile_v)

    def pad(x, shape):
        return jnp.pad(x, [(0, s - d) for d, s in zip(x.shape, shape)])

    def pad_gates(w, rows_p):          # per-gate pad so gate slices stay lane-aligned
        rows = w.shape[0]
        w3 = w.reshape(rows, 3, H)
        w3 = jnp.pad(w3, [(0, rows_p - rows), (0, 0), (0, Hp - H)])
        return w3.reshape(rows_p, 3 * Hp)

    attn_w, w_ih, out_w = params["attn_w"], params["w_ih"], params["out_w"]
    # Fused projection weight: rows [h_new_pad ; ctx_pad], bf16 storage.
    out_w_stacked = jnp.concatenate(
        [pad(out_w[:H], (Hp, Vp)), pad(out_w[H:], (Hp, Vp))], axis=0
    ).astype(jnp.bfloat16)
    # Vocab mask baked into padded bias: padded logits = NEG_INF (static).
    out_b = jnp.pad(params["out_b"], ((0, 0), (0, Vp - V)),
                    constant_values=NEG_INF).astype(jnp.float32)
    return {
        "embed":   params["embed"],
        "attn_wh": pad(attn_w[:H], (Hp, Hp)),
        "attn_we": pad(attn_w[H:], (Hp, Hp)),   # only used in prepare_encoder
        "attn_b":  pad(params["attn_b"], (1, Hp)),
        "v":       pad(params["v"], (1, Hp)),
        "w_ih_e":  pad_gates(w_ih[:E], E),
        "w_ih_c":  pad_gates(w_ih[E:], Hp),
        "b_ih":    pad_gates(params["b_ih"], 1),
        "w_hh":    pad_gates(params["w_hh"], Hp),
        "b_hh":    pad_gates(params["b_hh"], 1),
        "out_w":   out_w_stacked,               # (2Hp, Vp) bf16, streamed
        "out_b":   out_b,                       # (1, Vp) f32, mask baked
        # TODO(synk): attention/GRU weights (and ee/enc) could also be stored
        # bf16 ("ideally all weights"); kept f32 here for tight parity checks.
    }


def prepare_encoder(pp, encoder_outputs):
    """Per-sequence prep (hoist outside the autoregressive loop): transpose +
    pad encoder outputs (T to sublane only) and precompute the loop-invariant
    ee = enc @ W_e + b so the largest attention matmul leaves the kernel."""
    T, B, H = encoder_outputs.shape
    Hp = pp["attn_wh"].shape[0]
    Tp = _round_up(T, SUBLANE)
    enc_p = jnp.pad(jnp.transpose(encoder_outputs, (1, 0, 2)),
                    ((0, 0), (0, Tp - T), (0, Hp - H)))
    ee_p = jnp.einsum("bth,hk->btk", enc_p, pp["attn_we"]) + pp["attn_b"]
    return enc_p, ee_p


def decoder_forward(pp, input_ids, last_hidden, encoder_outputs, *, V,
                    tile_v=TILE_V):
    """Single decode step; mirrors the PyTorch Decoder.forward signature.
    input_ids (B,) int32, last_hidden (1,B,H) f32, encoder_outputs (T,B,H) f32."""
    H = last_hidden.shape[-1]
    T = encoder_outputs.shape[0]
    Hp = pp["attn_wh"].shape[0]

    emb = jnp.take(pp["embed"], input_ids, axis=0)        # (B, E) gather glue
    # TODO(synk): nn.Dropout(0.2) on `emb` omitted (eval-mode identity).
    h_p = jnp.pad(last_hidden[-1], ((0, 0), (0, Hp - H)))
    # NOTE: in an autoregressive loop, hoist prepare_encoder outside the loop
    # (encoder outputs are fixed) and carry the padded hidden state directly.
    enc_p, ee_p = prepare_encoder(pp, encoder_outputs)

    logits_p, hnew_p, attn_p = decode_step_padded(pp, emb, h_p, enc_p, ee_p,
                                                  T=T, tile_v=tile_v)
    # log_softmax in the wrapper fuses with the [:, :V] slice / downstream argmax
    # (exactly matches F.log_softmax; padded vocab cols already hold -inf).
    log_probs = jax.nn.log_softmax(logits_p[:, :V], axis=-1)
    return log_probs, hnew_p[:, :H][None], attn_p[:, None, :T]


# ---------------------------------------------------------------------------
# Pure-JAX reference (mirror of the PyTorch decoder) for correctness checking
# ---------------------------------------------------------------------------
def decoder_reference(params, input_ids, last_hidden, encoder_outputs):
    H = last_hidden.shape[-1]
    emb = params["embed"][input_ids]
    h = last_hidden[-1]
    enc = jnp.transpose(encoder_outputs, (1, 0, 2))
    B, T, _ = enc.shape
    hid_rep = jnp.broadcast_to(h[:, None, :], (B, T, H))
    cat = jnp.concatenate([hid_rep, enc], axis=2).reshape(B * T, 2 * H)
    energy = jnp.tanh(cat @ params["attn_w"] + params["attn_b"])
    scores = (energy @ params["v"].T).reshape(B, T)
    attn = jax.nn.softmax(scores, axis=-1)
    context = jnp.einsum("bt,bth->bh", attn, enc)
    x = jnp.concatenate([emb, context], axis=1)
    gi = x @ params["w_ih"] + params["b_ih"]
    gh = h @ params["w_hh"] + params["b_hh"]
    i_r, i_z, i_n = jnp.split(gi, 3, axis=1)
    h_r, h_z, h_n = jnp.split(gh, 3, axis=1)
    r = jax.nn.sigmoid(i_r + h_r)
    z = jax.nn.sigmoid(i_z + h_z)
    n = jnp.tanh(i_n + r * h_n)
    h_new = (1.0 - z) * n + z * h
    out_in = jnp.concatenate([h_new, context], axis=1)
    logits = out_in @ params["out_w"] + params["out_b"]
    return jax.nn.log_softmax(logits, axis=-1), h_new[None], attn[:, None, :]


if __name__ == "__main__":
    B, T = 2, 8
    E, H, V = 32, 32, 1000          # Vp=1024 -> two streamed 512-wide vocab tiles

    root = jax.random.PRNGKey(0)
    k_params, k_ids, k_hid, k_enc = jax.random.split(root, 4)
    params = init_params(k_params, E, H, V)
    pp = prepare_params(params, E, H, V)     # one-time split/pad/bf16 prep

    input_ids = jax.random.randint(k_ids, (B,), 0, V, dtype=jnp.int32)
    last_hidden = jax.random.normal(k_hid, (1, B, H), jnp.float32)
    encoder_outputs = jax.random.normal(k_enc, (T, B, H), jnp.float32)

    fwd = jax.jit(functools.partial(decoder_forward, V=V))
    log_probs, hidden, attn_weights = fwd(pp, input_ids, last_hidden, encoder_outputs)
    jax.block_until_ready((log_probs, hidden, attn_weights))

    assert log_probs.shape == (B, V)
    assert hidden.shape == (1, B, H)
    assert attn_weights.shape == (B, 1, T)

    # Correctness vs. pure-JAX f32 mirror of the PyTorch decoder (bf16 weight
    # storage + approx reciprocal account for the tolerances).
    ref_lp, ref_h, ref_a = decoder_reference(params, input_ids, last_hidden,
                                             encoder_outputs)
    for name, got, want, tol in (("log_probs", log_probs, ref_lp, 3e-2),
                                 ("hidden", hidden, ref_h, 2e-2),
                                 ("attn", attn_weights, ref_a, 2e-2)):
        err = float(jnp.max(jnp.abs(got - want)))
        assert err < tol, f"{name} mismatch, max abs err = {err}"

    # Short greedy decode loop (Seq2Seq.forward without teacher forcing):
    # encoder transpose/pad + ee precompute + weight prep hoisted outside the
    # loop; padded hidden state carried between steps.
    # TODO(synk): random teacher forcing is host-side control flow; greedy path shown.
    Hp = _round_up(H, LANE)
    enc_p, ee_p = prepare_encoder(pp, encoder_outputs)
    h_p = jnp.pad(last_hidden[-1], ((0, 0), (0, Hp - H)))
    step = jax.jit(functools.partial(decode_step_padded, T=T))
    tok = input_ids
    for _ in range(3):
        emb = jnp.take(pp["embed"], tok, axis=0)
        logits_p, h_p, _ = step(pp, emb, h_p, enc_p, ee_p)
        tok = jnp.argmax(logits_p[:, :V], axis=-1).astype(jnp.int32)
    jax.block_until_ready((logits_p, h_p, tok))
    assert bool(jnp.all(jnp.isfinite(logits_p[:, :V])))

    print("KERNEL_OK")
</pallas_src>

<mosaic_0001>
module attributes {stable_mosaic.version = 11 : i64} {
  func.func @proj_kernel(%arg0: i32, %arg1: memref<2x256xbf16, #tpu.memory_space<vmem>>, %arg2: memref<256x512xbf16, #tpu.memory_space<vmem>>, %arg3: memref<1x512xf32, #tpu.memory_space<vmem>>, %arg4: memref<2x512xf32, #tpu.memory_space<vmem>>) attributes {dimension_semantics = [#tpu.dimension_semantics<parallel>], iteration_bounds = array<i64: 2>, scalar_prefetch = 0 : i64, scratch_operands = 0 : i64, tpu.core_type = #tpu.core_type<tc>, window_params = [{pipeline_mode = #tpu.pipeline_mode<synchronous>, transform_indices = @transform_0, window_bounds = array<i64: 2, 256>}, {transform_indices = @transform_1, window_bounds = array<i64: 256, 512>}, {transform_indices = @transform_2, window_bounds = array<i64: 1, 512>}, {transform_indices = @transform_3, window_bounds = array<i64: 2, 512>}]} {
    %c0 = arith.constant 0 : index
    %c0_0 = arith.constant 0 : index
    %0 = vector.load %arg1[%c0, %c0_0] : memref<2x256xbf16, #tpu.memory_space<vmem>>, vector<2x256xbf16>
    %c0_1 = arith.constant 0 : index
    %c0_2 = arith.constant 0 : index
    %1 = vector.load %arg2[%c0_1, %c0_2] : memref<256x512xbf16, #tpu.memory_space<vmem>>, vector<256x512xbf16>
    %cst = arith.constant dense<0.000000e+00> : vector<2x512xf32>
    %2 = tpu.matmul %0, %1, %cst {dimension_numbers = #tpu.dot_dimension_numbers<[1], [0], [0], [1], [0, 0, 1, 1], [], []>} : vector<2x256xbf16>, vector<256x512xbf16>, vector<2x512xf32> -> vector<2x512xf32>
    %c0_3 = arith.constant 0 : index
    %c0_4 = arith.constant 0 : index
    %3 = vector.load %arg3[%c0_3, %c0_4] : memref<1x512xf32, #tpu.memory_space<vmem>>, vector<1x512xf32>
    %4 = vector.broadcast %3 : vector<1x512xf32> to vector<2x512xf32>
    %5 = arith.addf %2, %4 : vector<2x512xf32>
    %c0_5 = arith.constant 0 : index
    %c0_6 = arith.constant 0 : index
    %6 = vector.load %arg4[%c0_5, %c0_6] : memref<2x512xf32, #tpu.memory_space<vmem>>, vector<2x512xf32>
    tpu.vector_store %arg4[%c0_5, %c0_6], %5 {strides = array<i32>} : memref<2x512xf32, #tpu.memory_space<vmem>>, vector<2x512xf32>,
    return
  }
  func.func @transform_0(%arg0: i32) -> (i32, i32) {
    %c0_i32 = arith.constant 0 : i32
    %c0_i32_0 = arith.constant 0 : i32
    %c0_i32_1 = arith.constant 0 : i32
    return %c0_i32, %c0_i32_0 : i32, i32
  }
  func.func @transform_1(%arg0: i32) -> (i32, i32) {
    %c0_i32 = arith.constant 0 : i32
    %c0_i32_0 = arith.constant 0 : i32
    return %c0_i32, %arg0 : i32, i32
  }
  func.func @transform_2(%arg0: i32) -> (i32, i32) {
    %c0_i32 = arith.constant 0 : i32
    %c0_i32_0 = arith.constant 0 : i32
    return %c0_i32, %arg0 : i32, i32
  }
  func.func @transform_3(%arg0: i32) -> (i32, i32) {
    %c0_i32 = arith.constant 0 : i32
    %c0_i32_0 = arith.constant 0 : i32
    return %c0_i32, %arg0 : i32, i32
  }
}

module attributes {stable_mosaic.version = 11 : i64} {
  func.func @attn_gru_kernel(%arg0: i32, %arg1: memref<2x32xf32, #tpu.memory_space<vmem>>, %arg2: memref<2x128xf32, #tpu.memory_space<vmem>>, %arg3: memref<2x8x128xf32, #tpu.memory_space<vmem>>, %arg4: memref<2x8x128xf32, #tpu.memory_space<vmem>>, %arg5: memref<128x128xf32, #tpu.memory_space<vmem>>, %arg6: memref<1x128xf32, #tpu.memory_space<vmem>>, %arg7: memref<32x384xf32, #tpu.memory_space<vmem>>, %arg8: memref<128x384xf32, #tpu.memory_space<vmem>>, %arg9: memref<1x384xf32, #tpu.memory_space<vmem>>, %arg10: memref<128x384xf32, #tpu.memory_space<vmem>>, %arg11: memref<1x384xf32, #tpu.memory_space<vmem>>, %arg12: memref<2x128xf32, #tpu.memory_space<vmem>>, %arg13: memref<2x256xbf16, #tpu.memory_space<vmem>>, %arg14: memref<2x8xf32, #tpu.memory_space<vmem>>) attributes {dimension_semantics = [#tpu.dimension_semantics<arbitrary>], iteration_bounds = array<i64: 1>, scalar_prefetch = 0 : i64, scratch_operands = 0 : i64, tpu.core_type = #tpu.core_type<tc>, window_params = [{pipeline_mode = #tpu.pipeline_mode<synchronous>, transform_indices = @transform_0, window_bounds = array<i64: 2, 32>}, {pipeline_mode = #tpu.pipeline_mode<synchronous>, transform_indices = @transform_1, window_bounds = array<i64: 2, 128>}, {pipeline_mode = #tpu.pipeline_mode<synchronous>, transform_indices = @transform_2, window_bounds = array<i64: 2, 8, 128>}, {pipeline_mode = #tpu.pipeline_mode<synchronous>, transform_indices = @transform_3, window_bounds = array<i64: 2, 8, 128>}, {pipeline_mode = #tpu.pipeline_mode<synchronous>, transform_indices = @transform_4, window_bounds = array<i64: 128, 128>}, {pipeline_mode = #tpu.pipeline_mode<synchronous>, transform_indices = @transform_5, window_bounds = array<i64: 1, 128>}, {pipeline_mode = #tpu.pipeline_mode<synchronous>, transform_indices = @transform_6, window_bounds = array<i64: 32, 384>}, {pipeline_mode = #tpu.pipeline_mode<synchronous>, transform_indices = @transform_7, window_bounds = array<i64: 128, 384>}, {pipeline_mode = #tpu.pipeline_mode<synchronous>, transform_indices = @transform_8, window_bounds = array<i64: 1, 384>}, {pipeline_mode = #tpu.pipeline_mode<synchronous>, transform_indices = @transform_9, window_bounds = array<i64: 128, 384>}, {pipeline_mode = #tpu.pipeline_mode<synchronous>, transform_indices = @transform_10, window_bounds = array<i64: 1, 384>}, {pipeline_mode = #tpu.pipeline_mode<synchronous>, transform_indices = @transform_11, window_bounds = array<i64: 2, 128>}, {pipeline_mode = #tpu.pipeline_mode<synchronous>, transform_indices = @transform_12, window_bounds = array<i64: 2, 256>}, {pipeline_mode = #tpu.pipeline_mode<synchronous>, transform_indices = @transform_13, window_bounds = array<i64: 2, 8>}]} {
    %c0 = arith.constant 0 : index
    %c0_0 = arith.constant 0 : index
    %0 = vector.load %arg2[%c0, %c0_0] : memref<2x128xf32, #tpu.memory_space<vmem>>, vector<2x128xf32>
    %c0_1 = arith.constant 0 : index
    %c0_2 = arith.constant 0 : index
    %1 = vector.load %arg1[%c0_1, %c0_2] : memref<2x32xf32, #tpu.memory_space<vmem>>, vector<2x32xf32>
    %c0_3 = arith.constant 0 : index
    %c0_4 = arith.constant 0 : index
    %c0_5 = arith.constant 0 : index
    %2 = vector.load %arg3[%c0_3, %c0_4, %c0_5] : memref<2x8x128xf32, #tpu.memory_space<vmem>>, vector<2x8x128xf32>
    %c0_6 = arith.constant 0 : index
    %c0_7 = arith.constant 0 : index
    %3 = vector.load %arg5[%c0_6, %c0_7] : memref<128x128xf32, #tpu.memory_space<vmem>>, vector<128x128xf32>
    %cst = arith.constant dense<0.000000e+00> : vector<2x128xf32>
    %4 = tpu.matmul %0, %3, %cst {dimension_numbers = #tpu.dot_dimension_numbers<[1], [0], [0], [1], [0, 0, 1, 1], [], []>} : vector<2x128xf32>, vector<128x128xf32>, vector<2x128xf32> -> vector<2x128xf32>
    %c0_8 = arith.constant 0 : index
    %c0_9 = arith.constant 0 : index
    %c0_10 = arith.constant 0 : index
    %5 = vector.load %arg4[%c0_8, %c0_9, %c0_10] : memref<2x8x128xf32, #tpu.memory_space<vmem>>, vector<2x8x128xf32>
    %6 = vector.shape_cast %4 : vector<2x128xf32> to vector<2x1x128xf32>
    %7 = vector.broadcast %6 : vector<2x1x128xf32> to vector<2x8x128xf32>
    %8 = arith.addf %5, %7 : vector<2x8x128xf32>
    %9 = math.tanh %8 : vector<2x8x128xf32>
    %c0_11 = arith.constant 0 : index
    %c0_12 = arith.constant 0 : index
    %10 = vector.load %arg6[%c0_11, %c0_12] : memref<1x128xf32, #tpu.memory_space<vmem>>, vector<1x128xf32>
    %11 = vector.shape_cast %10 : vector<1x128xf32> to vector<1x1x128xf32>
    %12 = vector.broadcast %11 : vector<1x1x128xf32> to vector<2x8x128xf32>
    %13 = arith.mulf %9, %12 : vector<2x8x128xf32>
    %cst_13 = arith.constant dense<0.000000e+00> : vector<2x8xf32>
    %14 = vector.multi_reduction <add>, %13, %cst_13 [2] : vector<2x8x128xf32> to vector<2x8xf32>
    %cst_14 = arith.constant dense<0xFF800000> : vector<2xf32>
    %15 = vector.multi_reduction <maximumf>, %14, %cst_14 [1] : vector<2x8xf32> to vector<2xf32>
    %16 = vector.shape_cast %15 : vector<2xf32> to vector<2x1xf32>
    %17 = vector.broadcast %16 : vector<2x1xf32> to vector<2x8xf32>
    %18 = arith.subf %14, %17 : vector<2x8xf32>
    %19 = math.exp %18 : vector<2x8xf32>
    %cst_15 = arith.constant dense<0.000000e+00> : vector<2xf32>
    %20 = vector.multi_reduction <add>, %19, %cst_15 [1] : vector<2x8xf32> to vector<2xf32>
    %21 = vector.shape_cast %20 : vector<2xf32> to vector<2x1xf32>
    %22 = tpu.reciprocal %21 {approx = true} : vector<2x1xf32> -> vector<2x1xf32>
    %23 = vector.broadcast %22 : vector<2x1xf32> to vector<2x8xf32>
    %24 = arith.mulf %19, %23 : vector<2x8xf32>
    %c0_16 = arith.constant 0 : index
    %c0_17 = arith.constant 0 : index
    %25 = vector.load %arg14[%c0_16, %c0_17] : memref<2x8xf32, #tpu.memory_space<vmem>>, vector<2x8xf32>
    tpu.vector_store %arg14[%c0_16, %c0_17], %24 {strides = array<i32>} : memref<2x8xf32, #tpu.memory_space<vmem>>, vector<2x8xf32>,
    %26 = vector.shape_cast %24 : vector<2x8xf32> to vector<2x8x1xf32>
    %27 = vector.broadcast %26 : vector<2x8x1xf32> to vector<2x8x128xf32>
    %28 = arith.mulf %27, %2 : vector<2x8x128xf32>
    %cst_18 = arith.constant dense<0.000000e+00> : vector<2x128xf32>
    %29 = vector.multi_reduction <add>, %28, %cst_18 [1] : vector<2x8x128xf32> to vector<2x128xf32>
    %c0_19 = arith.constant 0 : index
    %c0_20 = arith.constant 0 : index
    %30 = vector.load %arg7[%c0_19, %c0_20] : memref<32x384xf32, #tpu.memory_space<vmem>>, vector<32x384xf32>
    %cst_21 = arith.constant dense<0.000000e+00> : vector<2x384xf32>
    %31 = tpu.matmul %1, %30, %cst_21 {dimension_numbers = #tpu.dot_dimension_numbers<[1], [0], [0], [1], [0, 0, 1, 1], [], []>} : vector<2x32xf32>, vector<32x384xf32>, vector<2x384xf32> -> vector<2x384xf32>
    %c0_22 = arith.constant 0 : index
    %c0_23 = arith.constant 0 : index
    %32 = vector.load %arg8[%c0_22, %c0_23] : memref<128x384xf32, #tpu.memory_space<vmem>>, vector<128x384xf32>
    %cst_24 = arith.constant dense<0.000000e+00> : vector<2x384xf32>
    %33 = tpu.matmul %29, %32, %cst_24 {dimension_numbers = #tpu.dot_dimension_numbers<[1], [0], [0], [1], [0, 0, 1, 1], [], []>} : vector<2x128xf32>, vector<128x384xf32>, vector<2x384xf32> -> vector<2x384xf32>
    %34 = arith.addf %31, %33 : vector<2x384xf32>
    %c0_25 = arith.constant 0 : index
    %c0_26 = arith.constant 0 : index
    %35 = vector.load %arg9[%c0_25, %c0_26] : memref<1x384xf32, #tpu.memory_space<vmem>>, vector<1x384xf32>
    %36 = vector.broadcast %35 : vector<1x384xf32> to vector<2x384xf32>
    %37 = arith.addf %34, %36 : vector<2x384xf32>
    %c0_27 = arith.constant 0 : index
    %c0_28 = arith.constant 0 : index
    %38 = vector.load %arg10[%c0_27, %c0_28] : memref<128x384xf32, #tpu.memory_space<vmem>>, vector<128x384xf32>
    %cst_29 = arith.constant dense<0.000000e+00> : vector<2x384xf32>
    %39 = tpu.matmul %0, %38, %cst_29 {dimension_numbers = #tpu.dot_dimension_numbers<[1], [0], [0], [1], [0, 0, 1, 1], [], []>} : vector<2x128xf32>, vector<128x384xf32>, vector<2x384xf32> -> vector<2x384xf32>
    %c0_30 = arith.constant 0 : index
    %c0_31 = arith.constant 0 : index
    %40 = vector.load %arg11[%c0_30, %c0_31] : memref<1x384xf32, #tpu.memory_space<vmem>>, vector<1x384xf32>
    %41 = vector.broadcast %40 : vector<1x384xf32> to vector<2x384xf32>
    %42 = arith.addf %39, %41 : vector<2x384xf32>
    %43 = vector.extract_strided_slice %37 {offsets = [0, 0], sizes = [2, 128], strides = [1, 1]} : vector<2x384xf32> to vector<2x128xf32>
    %44 = vector.extract_strided_slice %37 {offsets = [0, 128], sizes = [2, 128], strides = [1, 1]} : vector<2x384xf32> to vector<2x128xf32>
    %45 = vector.extract_strided_slice %37 {offsets = [0, 256], sizes = [2, 128], strides = [1, 1]} : vector<2x384xf32> to vector<2x128xf32>
    %46 = vector.extract_strided_slice %42 {offsets = [0, 0], sizes = [2, 128], strides = [1, 1]} : vector<2x384xf32> to vector<2x128xf32>
    %47 = vector.extract_strided_slice %42 {offsets = [0, 128], sizes = [2, 128], strides = [1, 1]} : vector<2x384xf32> to vector<2x128xf32>
    %48 = vector.extract_strided_slice %42 {offsets = [0, 256], sizes = [2, 128], strides = [1, 1]} : vector<2x384xf32> to vector<2x128xf32>
    %49 = arith.addf %43, %46 : vector<2x128xf32>
    %50 = arith.negf %49 : vector<2x128xf32>
    %51 = math.exp %50 : vector<2x128xf32>
    %cst_32 = arith.constant 1.000000e+00 : f32
    %52 = vector.broadcast %cst_32 : f32 to vector<2x128xf32>
    %53 = arith.addf %52, %51 : vector<2x128xf32>
    %54 = arith.divf %52, %53 : vector<2x128xf32>
    %55 = arith.addf %44, %47 : vector<2x128xf32>
    %56 = arith.negf %55 : vector<2x128xf32>
    %57 = math.exp %56 : vector<2x128xf32>
    %cst_33 = arith.constant 1.000000e+00 : f32
    %58 = vector.broadcast %cst_33 : f32 to vector<2x128xf32>
    %59 = arith.addf %58, %57 : vector<2x128xf32>
    %60 = arith.divf %58, %59 : vector<2x128xf32>
    %61 = arith.mulf %54, %48 : vector<2x128xf32>
    %62 = arith.addf %45, %61 : vector<2x128xf32>
    %63 = math.tanh %62 : vector<2x128xf32>
    %cst_34 = arith.constant 1.000000e+00 : f32
    %64 = vector.broadcast %cst_34 : f32 to vector<2x128xf32>
    %65 = arith.subf %64, %60 : vector<2x128xf32>
    %66 = arith.mulf %65, %63 : vector<2x128xf32>
    %67 = arith.mulf %60, %0 : vector<2x128xf32>
    %68 = arith.addf %66, %67 : vector<2x128xf32>
    %c0_35 = arith.constant 0 : index
    %c0_36 = arith.constant 0 : index
    %69 = vector.load %arg12[%c0_35, %c0_36] : memref<2x128xf32, #tpu.memory_space<vmem>>, vector<2x128xf32>
    tpu.vector_store %arg12[%c0_35, %c0_36], %68 {strides = array<i32>} : memref<2x128xf32, #tpu.memory_space<vmem>>, vector<2x128xf32>,
    %70 = arith.truncf %68 : vector<2x128xf32> to vector<2x128xbf16>
    %c0_37 = arith.constant 0 : index
    %c0_38 = arith.constant 0 : index
    %71 = vector.load %arg13[%c0_37, %c0_38] : memref<2x256xbf16, #tpu.memory_space<vmem>>, vector<2x128xbf16>
    tpu.vector_store %arg13[%c0_37, %c0_38], %70 {strides = array<i32>} : memref<2x256xbf16, #tpu.memory_space<vmem>>, vector<2x128xbf16>,
    %72 = arith.truncf %29 : vector<2x128xf32> to vector<2x128xbf16>
    %c0_39 = arith.constant 0 : index
    %c128 = arith.constant 128 : index
    %73 = vector.load %arg13[%c0_39, %c128] : memref<2x256xbf16, #tpu.memory_space<vmem>>, vector<2x128xbf16>
    tpu.vector_store %arg13[%c0_39, %c128], %72 {strides = array<i32>} : memref<2x256xbf16, #tpu.memory_space<vmem>>, vector<2x128xbf16>,
    return
  }
  func.func @transform_0(%arg0: i32) -> (i32, i32) {
    %c0_i32 = arith.constant 0 : i32
    %c0_i32_0 = arith.constant 0 : i32
    %c0_i32_1 = arith.constant 0 : i32
    return %c0_i32, %c0_i32_0 : i32, i32
  }
  func.func @transform_1(%arg0: i32) -> (i32, i32) {
    %c0_i32 = arith.constant 0 : i32
    %c0_i32_0 = arith.constant 0 : i32
    %c0_i32_1 = arith.constant 0 : i32
    return %c0_i32, %c0_i32_0 : i32, i32
  }
  func.func @transform_2(%arg0: i32) -> (i32, i32, i32) {
    %c0_i32 = arith.constant 0 : i32
    %c0_i32_0 = arith.constant 0 : i32
    %c0_i32_1 = arith.constant 0 : i32
    %c0_i32_2 = arith.constant 0 : i32
    return %c0_i32, %c0_i32_0, %c0_i32_1 : i32, i32, i32
  }
  func.func @transform_3(%arg0: i32) -> (i32, i32, i32) {
    %c0_i32 = arith.constant 0 : i32
    %c0_i32_0 = arith.constant 0 : i32
    %c0_i32_1 = arith.constant 0 : i32
    %c0_i32_2 = arith.constant 0 : i32
    return %c0_i32, %c0_i32_0, %c0_i32_1 : i32, i32, i32
  }
  func.func @transform_4(%arg0: i32) -> (i32, i32) {
    %c0_i32 = arith.constant 0 : i32
    %c0_i32_0 = arith.constant 0 : i32
    %c0_i32_1 = arith.constant 0 : i32
    return %c0_i32, %c0_i32_0 : i32, i32
  }
  func.func @transform_5(%arg0: i32) -> (i32, i32) {
    %c0_i32 = arith.constant 0 : i32
    %c0_i32_0 = arith.constant 0 : i32
    %c0_i32_1 = arith.constant 0 : i32
    return %c0_i32, %c0_i32_0 : i32, i32
  }
  func.func @transform_6(%arg0: i32) -> (i32, i32) {
    %c0_i32 = arith.constant 0 : i32
    %c0_i32_0 = arith.constant 0 : i32
    %c0_i32_1 = arith.constant 0 : i32
    return %c0_i32, %c0_i32_0 : i32, i32
  }
  func.func @transform_7(%arg0: i32) -> (i32, i32) {
    %c0_i32 = arith.constant 0 : i32
    %c0_i32_0 = arith.constant 0 : i32
    %c0_i32_1 = arith.constant 0 : i32
    return %c0_i32, %c0_i32_0 : i32, i32
  }
  func.func @transform_8(%arg0: i32) -> (i32, i32) {
    %c0_i32 = arith.constant 0 : i32
    %c0_i32_0 = arith.constant 0 : i32
    %c0_i32_1 = arith.constant 0 : i32
    return %c0_i32, %c0_i32_0 : i32, i32
  }
  func.func @transform_9(%arg0: i32) -> (i32, i32) {
    %c0_i32 = arith.constant 0 : i32
    %c0_i32_0 = arith.constant 0 : i32
    %c0_i32_1 = arith.constant 0 : i32
    return %c0_i32, %c0_i32_0 : i32, i32
  }
  func.func @transform_10(%arg0: i32) -> (i32, i32) {
    %c0_i32 = arith.constant 0 : i32
    %c0_i32_0 = arith.constant 0 : i32
    %c0_i32_1 = arith.constant 0 : i32
    return %c0_i32, %c0_i32_0 : i32, i32
  }
  func.func @transform_11(%arg0: i32) -> (i32, i32) {
    %c0_i32 = arith.constant 0 : i32
    %c0_i32_0 = arith.constant 0 : i32
    %c0_i32_1 = arith.constant 0 : i32
    return %c0_i32, %c0_i32_0 : i32, i32
  }
  func.func @transform_12(%arg0: i32) -> (i32, i32) {
    %c0_i32 = arith.constant 0 : i32
    %c0_i32_0 = arith.constant 0 : i32
    %c0_i32_1 = arith.constant 0 : i32
    return %c0_i32, %c0_i32_0 : i32, i32
  }
  func.func @transform_13(%arg0: i32) -> (i32, i32) {
    %c0_i32 = arith.constant 0 : i32
    %c0_i32_0 = arith.constant 0 : i32
    %c0_i32_1 = arith.constant 0 : i32
    return %c0_i32, %c0_i32_0 : i32, i32
  }
}

</mosaic_0001>

<llo_original>
// kernel: decoder_forward.3
$region0: #{decoder_forward.3}
  #allocation0 [shape = 'u32[]', space=smem, size = 0x4, offset = 0x4, fixed_abs, tag = 'smem constant byte address 0x4 - core index']
  #allocation1 [shape = 'u32[144,128]{1,0:T(1,128)}', space=vmem, size = 0x12000, scoped, tag = 'internal scratch']
  %s0 = inlined_call_operand.vmem [shape: bf16[2,256], index: 0, kind: input, shape index: {}]
  %s1 = inlined_call_operand.vmem [shape: bf16[256,1024], index: 1, kind: input, shape index: {}]
  %s2 = inlined_call_operand.vmem [shape: f32[1,1024], index: 2, kind: input, shape index: {}]
  %s3 = inlined_call_operand.vmem [shape: f32[2,1024], index: 3, kind: output, shape index: {}]
  %s4 = sld [smem:[#allocation0]]
  $region68: #{decoder_forward.3} parent=0
    _
  %s6 = ssub.s32 1, %s4
  %s7 = scalar_select 0, %s6, %s4
  $region1: #{decoder_forward.3} parent=0
    #allocation2 [shape = 'u8[524288]{0}', space=vmem, size = 0x80000, scoped, tag = 'input window, operand 1']
    loop: start=0, step=1, limit=4
    $region2: #{decoder_forward.3} parent=1 // loop_pre_header
      _
    $region3: #{decoder_forward.3} parent=1 // loop_header
      %s9 = sphi 0, %s13
      %p10 = scmp.ge.s32.totalorder %s9, 4
      %s17 = sphi 0, %s17
      %s19 = sphi 0, %s17
      %s20 = sphi 0, %s19
      %s34 = sphi 0, %s20
      %s40 = sphi 0, %s42
      %s43 = sphi 0, %s40
      %s44 = sphi 0, %s43
      %s60 = sphi 0, %s44
      %s66 = sphi 0, %s68
      %s69 = sphi 0, %s66
      %s70 = sphi 0, %s69
      %s86 = sphi 0, %s70
      %s92 = sphi 0, %s94
      %s95 = sphi 0, %s92
      %s96 = sphi 0, %s95
      %s112 = sphi 0, %s96
    $region4: #{decoder_forward.3} parent=1 // loop_header_branch
      %12 = sbr.rel (%p10) target = $region8
    $region5: #{decoder_forward.3} parent=1 // loop_body
      %s14 = ssub.s32 %s9, 1
      %s15 = ssub.s32 %s9, 2
      %s16 = sadd.s32 %s9, 1
      %s18 = sadd.s32 %s17, 1
      %p21 = scmp.eq.s32.totalorder %s9, 1
      %p22 = scmp.ne.s32.totalorder %s17, %s19
      %p23 = scmp.eq.s32.totalorder %s9, 0
      %p24 = por %p22, %p23
      %p25 = scmp.ne.s32.totalorder %s17, %s19
      %p26 = scmp.eq.s32.totalorder %s14, 1
      %p27 = por %p25, %p26
      %p28 = scmp.ne.s32.totalorder %s19, %s20
      %p29 = scmp.eq.s32.totalorder %s14, 0
      %p30 = por %p28, %p29
      %p31 = scmp.ne.s32.totalorder %s19, %s20
      %p32 = scmp.eq.s32.totalorder %s15, 1
      %p33 = por %p31, %p32
      %p35 = scmp.ne.s32.totalorder %s20, %s34
      %p36 = scmp.eq.s32.totalorder %s15, 0
      %p37 = por %p35, %p36
      %s38 = ssub.s32 %s9, %s16
      %p39 = scmp.eq.s32.totalorder %s38, 0
      %s41 = sadd.s32 %s40, 1
      %s42 = scalar_select %p39, %s40, %s41
      %p45 = pneg %p39
      %p46 = scmp.eq.s32.totalorder %s9, 1
      %p47 = por %p45, %p46
      %p48 = scmp.ne.s32.totalorder %s40, %s43
      %p49 = scmp.eq.s32.totalorder %s9, 0
      %p50 = por %p48, %p49
      %p51 = scmp.ne.s32.totalorder %s40, %s43
      %p52 = scmp.eq.s32.totalorder %s14, 1
      %p53 = por %p51, %p52
      %p54 = scmp.ne.s32.totalorder %s43, %s44
      %p55 = scmp.eq.s32.totalorder %s14, 0
      %p56 = por %p54, %p55
      %p57 = scmp.ne.s32.totalorder %s43, %s44
      %p58 = scmp.eq.s32.totalorder %s15, 1
      %p59 = por %p57, %p58
      %p61 = scmp.ne.s32.totalorder %s44, %s60
      %p62 = scmp.eq.s32.totalorder %s15, 0
      %p63 = por %p61, %p62
      %s64 = ssub.s32 %s9, %s16
      %p65 = scmp.eq.s32.totalorder %s64, 0
      %s67 = sadd.s32 %s66, 1
      %s68 = scalar_select %p65, %s66, %s67
      %p71 = pneg %p65
      %p72 = scmp.eq.s32.totalorder %s9, 1
      %p73 = por %p71, %p72
      %p74 = scmp.ne.s32.totalorder %s66, %s69
      %p75 = scmp.eq.s32.totalorder %s9, 0
      %p76 = por %p74, %p75
      %p77 = scmp.ne.s32.totalorder %s66, %s69
      %p78 = scmp.eq.s32.totalorder %s14, 1
      %p79 = por %p77, %p78
      %p80 = scmp.ne.s32.totalorder %s69, %s70
      %p81 = scmp.eq.s32.totalorder %s14, 0
      %p82 = por %p80, %p81
      %p83 = scmp.ne.s32.totalorder %s69, %s70
      %p84 = scmp.eq.s32.totalorder %s15, 1
      %p85 = por %p83, %p84
      %p87 = scmp.ne.s32.totalorder %s70, %s86
      %p88 = scmp.eq.s32.totalorder %s15, 0
      %p89 = por %p87, %p88
      %s90 = ssub.s32 %s9, %s16
      %p91 = scmp.eq.s32.totalorder %s90, 0
      %s93 = sadd.s32 %s92, 1
      %s94 = scalar_select %p91, %s92, %s93
      %p97 = pneg %p91
      %p98 = scmp.eq.s32.totalorder %s9, 1
      %p99 = por %p97, %p98
      %p100 = scmp.ne.s32.totalorder %s92, %s95
      %p101 = scmp.eq.s32.totalorder %s9, 0
      %p102 = por %p100, %p101
      %p103 = scmp.ne.s32.totalorder %s92, %s95
      %p104 = scmp.eq.s32.totalorder %s14, 1
      %p105 = por %p103, %p104
      %p106 = scmp.ne.s32.totalorder %s95, %s96
      %p107 = scmp.eq.s32.totalorder %s14, 0
      %p108 = por %p106, %p107
      %p109 = scmp.ne.s32.totalorder %s95, %s96
      %p110 = scmp.eq.s32.totalorder %s15, 1
      %p111 = por %p109, %p110
      %p113 = scmp.ne.s32.totalorder %s96, %s112
      %p114 = scmp.eq.s32.totalorder %s15, 0
      %p115 = por %p113, %p114
      %p116 = scmp.le.s32.totalorder 1, %s9
      %p117 = scmp.lt.s32.totalorder %s9, 3
      %p118 = pnand %p116, %p117
      %p119 = pneg %p118
      // Predicated region
      $region9: #{decoder_forward.3} parent=5 // pred_check
        _
      $region10: #{decoder_forward.3} parent=5 // pred_check_branch
        %121 = sbr.rel (%p118) target = $region12
      $region11: #{decoder_forward.3} parent=5 // pred_region
        %s122 = ssub.s32 %s9, 1
        // Predicated region
        $region13: #{decoder_forward.3} parent=11 // pred_check
          %p123 = pneg %p30
        $region14: #{decoder_forward.3} parent=11 // pred_check_branch
          %125 = sbr.rel (%p123) target = $region16
        $region15: #{decoder_forward.3} parent=11 // pred_region
          _
        $region16: #{decoder_forward.3} parent=11 // pred_fallthru
          _
      $region12: #{decoder_forward.3} parent=5 // pred_fallthru
        _
      %p126 = scmp.lt.s32.totalorder %s9, 2
      // Predicated region
      $region17: #{decoder_forward.3} parent=5 // pred_check
        %p127 = pneg %p126
      $region18: #{decoder_forward.3} parent=5 // pred_check_branch
        %129 = sbr.rel (%p127) target = $region20
      $region19: #{decoder_forward.3} parent=5 // pred_region
        // Predicated region
        $region21: #{decoder_forward.3} parent=19 // pred_check
          %p130 = pneg %p50
        $region22: #{decoder_forward.3} parent=19 // pred_check_branch
          %132 = sbr.rel (%p130) target = $region24
        $region23: #{decoder_forward.3} parent=19 // pred_region
          %s133 = sand.u32 %s40, 1
          %s134 = sand.u32 %s40, 1
          %s135 = smul.addr %s134, 512
          %s136 = scalar_lea.vmem [#allocation2], %s135
          %s137 = smul.u32 4, %s9
          %s138 = smul.addr %s137, 4
          %s139 = scalar_lea.vmem %s1, %s138
          // Predicated region
          $region25: #{decoder_forward.3} parent=23 // pred_check
            _
          $region26: #{decoder_forward.3} parent=23 // pred_check_branch
            %141 = sbr.rel (0) target = $region28
          $region27: #{decoder_forward.3} parent=23 // pred_region
            // Predicated region
            $region29: #{decoder_forward.3} parent=27 // pred_check
              _
            $region30: #{decoder_forward.3} parent=27 // pred_check_branch
              %143 = sbr.rel (0) target = $region32
            $region31: #{decoder_forward.3} parent=27 // pred_region
              loop: start=0, step=1, limit=1
              $region33: #{decoder_forward.3} parent=31 // loop_pre_header
                _
              $region34: #{decoder_forward.3} parent=31 // loop_header
                %s145 = sphi 0, %s149
                %p146 = scmp.ge.s32.totalorder %s145, 1
                %s150 = sphi %s139, %s139
                %s151 = sphi %s136, %s136
              $region35: #{decoder_forward.3} parent=31 // loop_header_branch
                %148 = sbr.rel (%p146) target = $region39
              $region36: #{decoder_forward.3} parent=31 // loop_body
                %v152 = vld [vmem:[%s150] sm:$0xff]
                %153 = vst [vmem:[%s151] sm:$0xff] %v152
                %v154 = vld [vmem:[%s150 + $0x8] sm:$0xff]
                %155 = vst [vmem:[%s151 + $0x8] sm:$0xff] %v154
                %v156 = vld [vmem:[%s150 + $0x20] sm:$0xff]
                %157 = vst [vmem:[%s151 + $0x10] sm:$0xff] %v156
                %v158 = vld [vmem:[%s150 + $0x28] sm:$0xff]
                %159 = vst [vmem:[%s151 + $0x18] sm:$0xff] %v158
                %v160 = vld [vmem:[%s150 + $0x40] sm:$0xff]
                %161 = vst [vmem:[%s151 + $0x20] sm:$0xff] %v160
                %v162 = vld [vmem:[%s150 + $0x48] sm:$0xff]
                %163 = vst [vmem:[%s151 + $0x28] sm:$0xff] %v162
                %v164 = vld [vmem:[%s150 + $0x60] sm:$0xff]
                %165 = vst [vmem:[%s151 + $0x30] sm:$0xff] %v164
                %v166 = vld [vmem:[%s150 + $0x68] sm:$0xff]
                %167 = vst [vmem:[%s151 + $0x38] sm:$0xff] %v166
                %v168 = vld [vmem:[%s150 + $0x80] sm:$0xff]
                %169 = vst [vmem:[%s151 + $0x40] sm:$0xff] %v168
                %v170 = vld [vmem:[%s150 + $0x88] sm:$0xff]
                %171 = vst [vmem:[%s151 + $0x48] sm:$0xff] %v170
                %v172 = vld [vmem:[%s150 + $0xa0] sm:$0xff]
                %173 = vst [vmem:[%s151 + $0x50] sm:$0xff] %v172
                %v174 = vld [vmem:[%s150 + $0xa8] sm:$0xff]
                %175 = vst [vmem:[%s151 + $0x58] sm:$0xff] %v174
                %v176 = vld [vmem:[%s150 + $0xc0] sm:$0xff]
                %177 = vst [vmem:[%s151 + $0x60] sm:$0xff] %v176
                %v178 = vld [vmem:[%s150 + $0xc8] sm:$0xff]
                %179 = vst [vmem:[%s151 + $0x68] sm:$0xff] %v178
                %v180 = vld [vmem:[%s150 + $0xe0] sm:$0xff]
                %181 = vst [vmem:[%s151 + $0x70] sm:$0xff] %v180
                %v182 = vld [vmem:[%s150 + $0xe8] sm:$0xff]
                %183 = vst [vmem:[%s151 + $0x78] sm:$0xff] %v182
                %v184 = vld [vmem:[%s150 + $0x100] sm:$0xff]
                %185 = vst [vmem:[%s151 + $0x80] sm:$0xff] %v184
                %v186 = vld [vmem:[%s150 + $0x108] sm:$0xff]
                %187 = vst [vmem:[%s151 + $0x88] sm:$0xff] %v186
                %v188 = vld [vmem:[%s150 + $0x120] sm:$0xff]
                %189 = vst [vmem:[%s151 + $0x90] sm:$0xff] %v188
                %v190 = vld [vmem:[%s150 + $0x128] sm:$0xff]
                %191 = vst [vmem:[%s151 + $0x98] sm:$0xff] %v190
                %v192 = vld [vmem:[%s150 + $0x140] sm:$0xff]
                %193 = vst [vmem:[%s151 + $0xa0] sm:$0xff] %v192
                %v194 = vld [vmem:[%s150 + $0x148] sm:$0xff]
                %195 = vst [vmem:[%s151 + $0xa8] sm:$0xff] %v194
                %v196 = vld [vmem:[%s150 + $0x160] sm:$0xff]
                %197 = vst [vmem:[%s151 + $0xb0] sm:$0xff] %v196
                %v198 = vld [vmem:[%s150 + $0x168] sm:$0xff]
                %199 = vst [vmem:[%s151 + $0xb8] sm:$0xff] %v198
                %v200 = vld [vmem:[%s150 + $0x180] sm:$0xff]
                %201 = vst [vmem:[%s151 + $0xc0] sm:$0xff] %v200
                %v202 = vld [vmem:[%s150 + $0x188] sm:$0xff]
                %203 = vst [vmem:[%s151 + $0xc8] sm:$0xff] %v202
                %v204 = vld [vmem:[%s150 + $0x1a0] sm:$0xff]
                %205 = vst [vmem:[%s151 + $0xd0] sm:$0xff] %v204
                %v206 = vld [vmem:[%s150 + $0x1a8] sm:$0xff]
                %207 = vst [vmem:[%s151 + $0xd8] sm:$0xff] %v206
                %v208 = vld [vmem:[%s150 + $0x1c0] sm:$0xff]
                %209 = vst [vmem:[%s151 + $0xe0] sm:$0xff] %v208
                %v210 = vld [vmem:[%s150 + $0x1c8] sm:$0xff]
                %211 = vst [vmem:[%s151 + $0xe8] sm:$0xff] %v210
                %v212 = vld [vmem:[%s150 + $0x1e0] sm:$0xff]
                %213 = vst [vmem:[%s151 + $0xf0] sm:$0xff] %v212
                %v214 = vld [vmem:[%s150 + $0x1e8] sm:$0xff]
                %215 = vst [vmem:[%s151 + $0xf8] sm:$0xff] %v214
                %v216 = vld [vmem:[%s150 + $0x200] sm:$0xff]
                %217 = vst [vmem:[%s151 + $0x100] sm:$0xff] %v216
                %v218 = vld [vmem:[%s150 + $0x208] sm:$0xff]
                %219 = vst [vmem:[%s151 + $0x108] sm:$0xff] %v218
                %v220 = vld [vmem:[%s150 + $0x220] sm:$0xff]
                %221 = vst [vmem:[%s151 + $0x110] sm:$0xff] %v220
                %v222 = vld [vmem:[%s150 + $0x228] sm:$0xff]
                %223 = vst [vmem:[%s151 + $0x118] sm:$0xff] %v222
                %v224 = vld [vmem:[%s150 + $0x240] sm:$0xff]
                %225 = vst [vmem:[%s151 + $0x120] sm:$0xff] %v224
                %v226 = vld [vmem:[%s150 + $0x248] sm:$0xff]
                %227 = vst [vmem:[%s151 + $0x128] sm:$0xff] %v226
                %v228 = vld [vmem:[%s150 + $0x260] sm:$0xff]
                %229 = vst [vmem:[%s151 + $0x130] sm:$0xff] %v228
                %v230 = vld [vmem:[%s150 + $0x268] sm:$0xff]
                %231 = vst [vmem:[%s151 + $0x138] sm:$0xff] %v230
                %v232 = vld [vmem:[%s150 + $0x280] sm:$0xff]
                %233 = vst [vmem:[%s151 + $0x140] sm:$0xff] %v232
                %v234 = vld [vmem:[%s150 + $0x288] sm:$0xff]
                %235 = vst [vmem:[%s151 + $0x148] sm:$0xff] %v234
                %v236 = vld [vmem:[%s150 + $0x2a0] sm:$0xff]
                %237 = vst [vmem:[%s151 + $0x150] sm:$0xff] %v236
                %v238 = vld [vmem:[%s150 + $0x2a8] sm:$0xff]
                %239 = vst [vmem:[%s151 + $0x158] sm:$0xff] %v238
                %v240 = vld [vmem:[%s150 + $0x2c0] sm:$0xff]
                %241 = vst [vmem:[%s151 + $0x160] sm:$0xff] %v240
                %v242 = vld [vmem:[%s150 + $0x2c8] sm:$0xff]
                %243 = vst [vmem:[%s151 + $0x168] sm:$0xff] %v242
                %v244 = vld [vmem:[%s150 + $0x2e0] sm:$0xff]
                %245 = vst [vmem:[%s151 + $0x170] sm:$0xff] %v244
                %v246 = vld [vmem:[%s150 + $0x2e8] sm:$0xff]
                %247 = vst [vmem:[%s151 + $0x178] sm:$0xff] %v246
                %v248 = vld [vmem:[%s150 + $0x300] sm:$0xff]
                %249 = vst [vmem:[%s151 + $0x180] sm:$0xff] %v248
                %v250 = vld [vmem:[%s150 + $0x308] sm:$0xff]
                %251 = vst [vmem:[%s151 + $0x188] sm:$0xff] %v250
                %v252 = vld [vmem:[%s150 + $0x320] sm:$0xff]
                %253 = vst [vmem:[%s151 + $0x190] sm:$0xff] %v252
                %v254 = vld [vmem:[%s150 + $0x328] sm:$0xff]
                %255 = vst [vmem:[%s151 + $0x198] sm:$0xff] %v254
                %v256 = vld [vmem:[%s150 + $0x340] sm:$0xff]
                %257 = vst [vmem:[%s151 + $0x1a0] sm:$0xff] %v256
                %v258 = vld [vmem:[%s150 + $0x348] sm:$0xff]
                %259 = vst [vmem:[%s151 + $0x1a8] sm:$0xff] %v258
                %v260 = vld [vmem:[%s150 + $0x360] sm:$0xff]
                %261 = vst [vmem:[%s151 + $0x1b0] sm:$0xff] %v260
                %v262 = vld [vmem:[%s150 + $0x368] sm:$0xff]
                %263 = vst [vmem:[%s151 + $0x1b8] sm:$0xff] %v262
                %v264 = vld [vmem:[%s150 + $0x380] sm:$0xff]
                %265 = vst [vmem:[%s151 + $0x1c0] sm:$0xff] %v264
                %v266 = vld [vmem:[%s150 + $0x388] sm:$0xff]
                %267 = vst [vmem:[%s151 + $0x1c8] sm:$0xff] %v266
                %v268 = vld [vmem:[%s150 + $0x3a0] sm:$0xff]
                %269 = vst [vmem:[%s151 + $0x1d0] sm:$0xff] %v268
                %v270 = vld [vmem:[%s150 + $0x3a8] sm:$0xff]
                %271 = vst [vmem:[%s151 + $0x1d8] sm:$0xff] %v270
                %v272 = vld [vmem:[%s150 + $0x3c0] sm:$0xff]
                %273 = vst [vmem:[%s151 + $0x1e0] sm:$0xff] %v272
                %v274 = vld [vmem:[%s150 + $0x3c8] sm:$0xff]
                %275 = vst [vmem:[%s151 + $0x1e8] sm:$0xff] %v274
                %v276 = vld [vmem:[%s150 + $0x3e0] sm:$0xff]
                %277 = vst [vmem:[%s151 + $0x1f0] sm:$0xff] %v276
                %v278 = vld [vmem:[%s150 + $0x3e8] sm:$0xff]
                %279 = vst [vmem:[%s151 + $0x1f8] sm:$0xff] %v278
              $region37: #{decoder_forward.3} parent=31 // loop_footer
                %s149 = sadd.s32 1, %s145
              $region38: #{decoder_forward.3} parent=31 // loop_footer_branch
                %144 = sbr.rel target = $region34
              $region39: #{decoder_forward.3} parent=31 // loop_exit
                _
            $region32: #{decoder_forward.3} parent=27 // pred_fallthru
              _
            // Predicated region
            $region40: #{decoder_forward.3} parent=27 // pred_check
              _
            $region41: #{decoder_forward.3} parent=27 // pred_check_branch
              %281 = sbr.rel target = $region43
            $region42: #{decoder_forward.3} parent=27 // pred_region
              _
            $region43: #{decoder_forward.3} parent=27 // pred_fallthru
              _
          $region28: #{decoder_forward.3} parent=23 // pred_fallthru
            _
          %282 = vnop
        $region24: #{decoder_forward.3} parent=19 // pred_fallthru
          _
        // Predicated region
        $region44: #{decoder_forward.3} parent=19 // pred_check
          %p283 = pneg %p76
        $region45: #{decoder_forward.3} parent=19 // pred_check_branch
          %285 = sbr.rel (%p283) target = $region47
        $region46: #{decoder_forward.3} parent=19 // pred_region
          %s286 = smul.u32 4, %s9
          %p287 = scmp.lt.s32.totalorder %s286, 7
          %s288 = scalar_select %p287, %s286, 7
          %s289 = scalar_lea.vmem %s2, %s288
          %s290 = smul.u32 4, %s9
        $region47: #{decoder_forward.3} parent=19 // pred_fallthru
          _
      $region20: #{decoder_forward.3} parent=5 // pred_fallthru
        _
      %p291 = scmp.le.s32.totalorder 1, %s9
      %p292 = scmp.lt.s32.totalorder %s9, 3
      %p293 = pnand %p291, %p292
      %p294 = pneg %p293
      // Predicated region
      $region48: #{decoder_forward.3} parent=5 // pred_check
        _
      $region49: #{decoder_forward.3} parent=5 // pred_check_branch
        %296 = sbr.rel (%p293) target = $region51
      $region50: #{decoder_forward.3} parent=5 // pred_region
        %s297 = ssub.s32 %s9, 1
        %s298 = sand.u32 %s43, 1
        %s299 = sand.u32 %s43, 1
        %s300 = smul.addr %s299, 512
        %s301 = scalar_lea.vmem [#allocation2], %s300
        // Predicated region
        $region52: #{decoder_forward.3} parent=50 // pred_check
          %p302 = pneg %p56
        $region53: #{decoder_forward.3} parent=50 // pred_check_branch
          %304 = sbr.rel (%p302) target = $region55
        $region54: #{decoder_forward.3} parent=50 // pred_region
          _
        $region55: #{decoder_forward.3} parent=50 // pred_fallthru
          _
        %p305 = pneg %p30
        %p306 = pneg %p27
        %s307 = sand.u32 %s43, 1
        %s308 = sand.u32 %s43, 1
        %s309 = smul.addr %s308, 512
        %s310 = scalar_lea.vmem [#allocation2], %s309
        %p311 = pneg %p56
        %p312 = pneg %p53
        %s313 = smul.u32 4, %s14
        %p314 = scmp.lt.s32.totalorder %s313, 7
        %s315 = scalar_select %p314, %s313, 7
        %s316 = scalar_lea.vmem %s2, %s315
        %p317 = pneg %p82
        %p318 = pneg %p79
        %p319 = pneg %p108
        %p320 = pneg %p105
        %s321 = smul.u32 4, %s14
        %p322 = scmp.lt.s32.totalorder %s321, 7
        %s323 = scalar_select %p322, %s321, 7
        %s324 = smul.addr %s323, 2
        %s325 = scalar_lea.vmem %s3, %s324
        %s326 = smul.u32 4, %s14
        %s327 = smul.u32 4, %s14
        %p328 = scmp.lt.s32.totalorder %s327, 7
        %s329 = scalar_select %p328, %s327, 7
        %s330 = scalar_lea.vmem %s2, %s329
        %s331 = smul.u32 4, %s14
        %s332 = smul.u32 4, %s14
        %p333 = scmp.lt.s32.totalorder %s332, 7
        %s334 = scalar_select %p333, %s332, 7
        %s335 = smul.addr %s334, 2
        %s336 = scalar_lea.vmem %s3, %s335
        %s337 = smul.u32 4, %s14
        %v338 = vld [vmem:[%s0] sm:$0x3]
        %v339 = vld [vmem:[%s301] sm:$0xff]
        %v340 = vld [vmem:[%s301 + $0x8] sm:$0xff]
        %v341 = vld [vmem:[%s301 + $0x10] sm:$0xff]
        %v342 = vld [vmem:[%s301 + $0x18] sm:$0xff]
        %v343 = vld [vmem:[%s301 + $0x20] sm:$0xff]
        %v344 = vld [vmem:[%s301 + $0x28] sm:$0xff]
        %v345 = vld [vmem:[%s301 + $0x30] sm:$0xff]
        %v346 = vld [vmem:[%s301 + $0x38] sm:$0xff]
        %v347 = vld [vmem:[%s301 + $0x40] sm:$0xff]
        %v348 = vld [vmem:[%s301 + $0x48] sm:$0xff]
        %v349 = vld [vmem:[%s301 + $0x50] sm:$0xff]
        %v350 = vld [vmem:[%s301 + $0x58] sm:$0xff]
        %v351 = vld [vmem:[%s301 + $0x60] sm:$0xff]
        %v352 = vld [vmem:[%s301 + $0x68] sm:$0xff]
        %v353 = vld [vmem:[%s301 + $0x70] sm:$0xff]
        %v354 = vld [vmem:[%s301 + $0x78] sm:$0xff]
        %v355 = vld [vmem:[%s301 + $0x80] sm:$0xff]
        %v356 = vld [vmem:[%s301 + $0x88] sm:$0xff]
        %v357 = vld [vmem:[%s301 + $0x90] sm:$0xff]
        %v358 = vld [vmem:[%s301 + $0x98] sm:$0xff]
        %v359 = vld [vmem:[%s301 + $0xa0] sm:$0xff]
        %v360 = vld [vmem:[%s301 + $0xa8] sm:$0xff]
        %v361 = vld [vmem:[%s301 + $0xb0] sm:$0xff]
        %v362 = vld [vmem:[%s301 + $0xb8] sm:$0xff]
        %v363 = vld [vmem:[%s301 + $0xc0] sm:$0xff]
        %v364 = vld [vmem:[%s301 + $0xc8] sm:$0xff]
        %v365 = vld [vmem:[%s301 + $0xd0] sm:$0xff]
        %v366 = vld [vmem:[%s301 + $0xd8] sm:$0xff]
        %v367 = vld [vmem:[%s301 + $0xe0] sm:$0xff]
        %v368 = vld [vmem:[%s301 + $0xe8] sm:$0xff]
        %v369 = vld [vmem:[%s301 + $0xf0] sm:$0xff]
        %v370 = vld [vmem:[%s301 + $0xf8] sm:$0xff]
        %v371 = vld [vmem:[%s301 + $0x100] sm:$0xff]
        %v372 = vld [vmem:[%s301 + $0x108] sm:$0xff]
        %v373 = vld [vmem:[%s301 + $0x110] sm:$0xff]
        %v374 = vld [vmem:[%s301 + $0x118] sm:$0xff]
        %v375 = vld [vmem:[%s301 + $0x120] sm:$0xff]
        %v376 = vld [vmem:[%s301 + $0x128] sm:$0xff]
        %v377 = vld [vmem:[%s301 + $0x130] sm:$0xff]
        %v378 = vld [vmem:[%s301 + $0x138] sm:$0xff]
        %v379 = vld [vmem:[%s301 + $0x140] sm:$0xff]
        %v380 = vld [vmem:[%s301 + $0x148] sm:$0xff]
        %v381 = vld [vmem:[%s301 + $0x150] sm:$0xff]
        %v382 = vld [vmem:[%s301 + $0x158] sm:$0xff]
        %v383 = vld [vmem:[%s301 + $0x160] sm:$0xff]
        %v384 = vld [vmem:[%s301 + $0x168] sm:$0xff]
        %v385 = vld [vmem:[%s301 + $0x170] sm:$0xff]
        %v386 = vld [vmem:[%s301 + $0x178] sm:$0xff]
        %v387 = vld [vmem:[%s301 + $0x180] sm:$0xff]
        %v388 = vld [vmem:[%s301 + $0x188] sm:$0xff]
        %v389 = vld [vmem:[%s301 + $0x190] sm:$0xff]
        %v390 = vld [vmem:[%s301 + $0x198] sm:$0xff]
        %v391 = vld [vmem:[%s301 + $0x1a0] sm:$0xff]
        %v392 = vld [vmem:[%s301 + $0x1a8] sm:$0xff]
        %v393 = vld [vmem:[%s301 + $0x1b0] sm:$0xff]
        %v394 = vld [vmem:[%s301 + $0x1b8] sm:$0xff]
        %v395 = vld [vmem:[%s301 + $0x1c0] sm:$0xff]
        %v396 = vld [vmem:[%s301 + $0x1c8] sm:$0xff]
        %v397 = vld [vmem:[%s301 + $0x1d0] sm:$0xff]
        %v398 = vld [vmem:[%s301 + $0x1d8] sm:$0xff]
        %v399 = vld [vmem:[%s301 + $0x1e0] sm:$0xff]
        %v400 = vld [vmem:[%s301 + $0x1e8] sm:$0xff]
        %v401 = vld [vmem:[%s301 + $0x1f0] sm:$0xff]
        %v402 = vld [vmem:[%s301 + $0x1f8] sm:$0xff]
        %v403 = vld [vmem:[%s330] sm:$0xf]
        %v405 = vlaneseq
        %v406 = vshrl.u32 %v405, 7
        %v407 = vsub.s32 0, %v406
        %v408 = vrot.slane %v403, %v407
        %v409 = vlaneseq
        %v410 = vshrl.u32 %v409, 7
        %v411 = vsub.s32 1, %v410
        %v412 = vrot.slane %v403, %v411
        %v413 = vlaneseq
        %v414 = vshrl.u32 %v413, 7
        %v415 = vsub.s32 2, %v414
        %v416 = vrot.slane %v403, %v415
        %v417 = vlaneseq
        %v418 = vshrl.u32 %v417, 7
        %v419 = vsub.s32 3, %v418
        %v420 = vrot.slane %v403, %v419
        %v427 = vunpack.c.l.s4 1966171168
        %v428 = vunpack.c.0.s8 %v427
        %v429 = vlaneseq
        %v430 = vshrl.u32 %v429, 7
        %v431 = vsub.s32 %v428, %v430
        %v432 = vrot.slane %v338, %v431
        %v433 = vcombine.high %v432, %v432
        %v435 = vunpack.c.l.s4 1966171168
        %v436 = vunpack.c.0.s8 %v435
        %v437 = vlaneseq
        %v438 = vshrl.u32 %v437, 7
        %v439 = vsub.s32 %v436, %v438
        %v440 = vrot.slane %v432, %v439
        %v442 = vunpack.c.l.s4 1966171168
        %v443 = vunpack.c.0.s8 %v442
        %v444 = vlaneseq
        %v445 = vshrl.u32 %v444, 7
        %v446 = vsub.s32 %v443, %v445
        %v447 = vrot.slane %v433, %v446
        %v514 = vunpack.c.l.b16 %v339
        %v515 = vunpack.c.h.b16 %v339
        %v516 = vunpack.c.l.b16 %v340
        %v517 = vunpack.c.h.b16 %v340
        %v518 = vunpack.c.l.b16 %v341
        %v519 = vunpack.c.h.b16 %v341
        %v520 = vunpack.c.l.b16 %v342
        %v521 = vunpack.c.h.b16 %v342
        %v522 = vunpack.c.l.b16 %v343
        %v523 = vunpack.c.h.b16 %v343
        %v524 = vunpack.c.l.b16 %v344
        %v525 = vunpack.c.h.b16 %v344
        %v526 = vunpack.c.l.b16 %v345
        %v527 = vunpack.c.h.b16 %v345
        %v528 = vunpack.c.l.b16 %v346
        %v529 = vunpack.c.h.b16 %v346
        %v530 = vunpack.c.l.b16 %v347
        %v531 = vunpack.c.h.b16 %v347
        %v532 = vunpack.c.l.b16 %v348
        %v533 = vunpack.c.h.b16 %v348
        %v534 = vunpack.c.l.b16 %v349
        %v535 = vunpack.c.h.b16 %v349
        %v536 = vunpack.c.l.b16 %v350
        %v537 = vunpack.c.h.b16 %v350
        %v538 = vunpack.c.l.b16 %v351
        %v539 = vunpack.c.h.b16 %v351
        %v540 = vunpack.c.l.b16 %v352
        %v541 = vunpack.c.h.b16 %v352
        %v542 = vunpack.c.l.b16 %v353
        %v543 = vunpack.c.h.b16 %v353
        %v544 = vunpack.c.l.b16 %v354
        %v545 = vunpack.c.h.b16 %v354
        %v546 = vunpack.c.l.b16 %v355
        %v547 = vunpack.c.h.b16 %v355
        %v548 = vunpack.c.l.b16 %v356
        %v549 = vunpack.c.h.b16 %v356
        %v550 = vunpack.c.l.b16 %v357
        %v551 = vunpack.c.h.b16 %v357
        %v552 = vunpack.c.l.b16 %v358
        %v553 = vunpack.c.h.b16 %v358
        %v554 = vunpack.c.l.b16 %v359
        %v555 = vunpack.c.h.b16 %v359
        %v556 = vunpack.c.l.b16 %v360
        %v557 = vunpack.c.h.b16 %v360
        %v558 = vunpack.c.l.b16 %v361
        %v559 = vunpack.c.h.b16 %v361
        %v560 = vunpack.c.l.b16 %v362
        %v561 = vunpack.c.h.b16 %v362
        %v562 = vunpack.c.l.b16 %v363
        %v563 = vunpack.c.h.b16 %v363
        %v564 = vunpack.c.l.b16 %v364
        %v565 = vunpack.c.h.b16 %v364
        %v566 = vunpack.c.l.b16 %v365
        %v567 = vunpack.c.h.b16 %v365
        %v568 = vunpack.c.l.b16 %v366
        %v569 = vunpack.c.h.b16 %v366
        %v570 = vunpack.c.l.b16 %v367
        %v571 = vunpack.c.h.b16 %v367
        %v572 = vunpack.c.l.b16 %v368
        %v573 = vunpack.c.h.b16 %v368
        %v574 = vunpack.c.l.b16 %v369
        %v575 = vunpack.c.h.b16 %v369
        %v576 = vunpack.c.l.b16 %v370
        %v577 = vunpack.c.h.b16 %v370
        %v578 = vunpack.c.l.b16 %v371
        %v579 = vunpack.c.h.b16 %v371
        %v580 = vunpack.c.l.b16 %v372
        %v581 = vunpack.c.h.b16 %v372
        %v582 = vunpack.c.l.b16 %v373
        %v583 = vunpack.c.h.b16 %v373
        %v584 = vunpack.c.l.b16 %v374
        %v585 = vunpack.c.h.b16 %v374
        %v586 = vunpack.c.l.b16 %v375
        %v587 = vunpack.c.h.b16 %v375
        %v588 = vunpack.c.l.b16 %v376
        %v589 = vunpack.c.h.b16 %v376
        %v590 = vunpack.c.l.b16 %v377
        %v591 = vunpack.c.h.b16 %v377
        %v592 = vunpack.c.l.b16 %v378
        %v593 = vunpack.c.h.b16 %v378
        %v594 = vunpack.c.l.b16 %v379
        %v595 = vunpack.c.h.b16 %v379
        %v596 = vunpack.c.l.b16 %v380
        %v597 = vunpack.c.h.b16 %v380
        %v598 = vunpack.c.l.b16 %v381
        %v599 = vunpack.c.h.b16 %v381
        %v600 = vunpack.c.l.b16 %v382
        %v601 = vunpack.c.h.b16 %v382
        %v602 = vunpack.c.l.b16 %v383
        %v603 = vunpack.c.h.b16 %v383
        %v604 = vunpack.c.l.b16 %v384
        %v605 = vunpack.c.h.b16 %v384
        %v606 = vunpack.c.l.b16 %v385
        %v607 = vunpack.c.h.b16 %v385
        %v608 = vunpack.c.l.b16 %v386
        %v609 = vunpack.c.h.b16 %v386
        %v610 = vunpack.c.l.b16 %v387
        %v611 = vunpack.c.h.b16 %v387
        %v612 = vunpack.c.l.b16 %v388
        %v613 = vunpack.c.h.b16 %v388
        %v614 = vunpack.c.l.b16 %v389
        %v615 = vunpack.c.h.b16 %v389
        %v616 = vunpack.c.l.b16 %v390
        %v617 = vunpack.c.h.b16 %v390
        %v618 = vunpack.c.l.b16 %v391
        %v619 = vunpack.c.h.b16 %v391
        %v620 = vunpack.c.l.b16 %v392
        %v621 = vunpack.c.h.b16 %v392
        %v622 = vunpack.c.l.b16 %v393
        %v623 = vunpack.c.h.b16 %v393
        %v624 = vunpack.c.l.b16 %v394
        %v625 = vunpack.c.h.b16 %v394
        %v626 = vunpack.c.l.b16 %v395
        %v627 = vunpack.c.h.b16 %v395
        %v628 = vunpack.c.l.b16 %v396
        %v629 = vunpack.c.h.b16 %v396
        %v630 = vunpack.c.l.b16 %v397
        %v631 = vunpack.c.h.b16 %v397
        %v632 = vunpack.c.l.b16 %v398
        %v633 = vunpack.c.h.b16 %v398
        %v634 = vunpack.c.l.b16 %v399
        %v635 = vunpack.c.h.b16 %v399
        %v636 = vunpack.c.l.b16 %v400
        %v637 = vunpack.c.h.b16 %v400
        %v638 = vunpack.c.l.b16 %v401
        %v639 = vunpack.c.h.b16 %v401
        %v640 = vunpack.c.l.b16 %v402
        %v641 = vunpack.c.h.b16 %v402
        %v642 = vpack.c.b16 %v518, %v514
        %v643 = vpack.c.b16 %v519, %v515
        %v644 = vpack.c.b16 %v520, %v516
        %v645 = vpack.c.b16 %v521, %v517
        %v646 = vpack.c.b16 %v526, %v522
        %v647 = vpack.c.b16 %v527, %v523
        %v648 = vpack.c.b16 %v528, %v524
        %v649 = vpack.c.b16 %v529, %v525
        %v650 = vpack.c.b16 %v534, %v530
        %v651 = vpack.c.b16 %v535, %v531
        %v652 = vpack.c.b16 %v536, %v532
        %v653 = vpack.c.b16 %v537, %v533
        %v654 = vpack.c.b16 %v542, %v538
        %v655 = vpack.c.b16 %v543, %v539
        %v656 = vpack.c.b16 %v544, %v540
        %v657 = vpack.c.b16 %v545, %v541
        %v658 = vpack.c.b16 %v550, %v546
        %v659 = vpack.c.b16 %v551, %v547
        %v660 = vpack.c.b16 %v552, %v548
        %v661 = vpack.c.b16 %v553, %v549
        %v662 = vpack.c.b16 %v558, %v554
        %v663 = vpack.c.b16 %v559, %v555
        %v664 = vpack.c.b16 %v560, %v556
        %v665 = vpack.c.b16 %v561, %v557
        %v666 = vpack.c.b16 %v566, %v562
        %v667 = vpack.c.b16 %v567, %v563
        %v668 = vpack.c.b16 %v568, %v564
        %v669 = vpack.c.b16 %v569, %v565
        %v670 = vpack.c.b16 %v574, %v570
        %v671 = vpack.c.b16 %v575, %v571
        %v672 = vpack.c.b16 %v576, %v572
        %v673 = vpack.c.b16 %v577, %v573
        %v674 = vpack.c.b16 %v582, %v578
        %v675 = vpack.c.b16 %v583, %v579
        %v676 = vpack.c.b16 %v584, %v580
        %v677 = vpack.c.b16 %v585, %v581
        %v678 = vpack.c.b16 %v590, %v586
        %v679 = vpack.c.b16 %v591, %v587
        %v680 = vpack.c.b16 %v592, %v588
        %v681 = vpack.c.b16 %v593, %v589
        %v682 = vpack.c.b16 %v598, %v594
        %v683 = vpack.c.b16 %v599, %v595
        %v684 = vpack.c.b16 %v600, %v596
        %v685 = vpack.c.b16 %v601, %v597
        %v686 = vpack.c.b16 %v606, %v602
        %v687 = vpack.c.b16 %v607, %v603
        %v688 = vpack.c.b16 %v608, %v604
        %v689 = vpack.c.b16 %v609, %v605
        %v690 = vpack.c.b16 %v614, %v610
        %v691 = vpack.c.b16 %v615, %v611
        %v692 = vpack.c.b16 %v616, %v612
        %v693 = vpack.c.b16 %v617, %v613
        %v694 = vpack.c.b16 %v622, %v618
        %v695 = vpack.c.b16 %v623, %v619
        %v696 = vpack.c.b16 %v624, %v620
        %v697 = vpack.c.b16 %v625, %v621
        %v698 = vpack.c.b16 %v630, %v626
        %v699 = vpack.c.b16 %v631, %v627
        %v700 = vpack.c.b16 %v632, %v628
        %v701 = vpack.c.b16 %v633, %v629
        %v702 = vpack.c.b16 %v638, %v634
        %v703 = vpack.c.b16 %v639, %v635
        %v704 = vpack.c.b16 %v640, %v636
        %v705 = vpack.c.b16 %v641, %v637
        %770 = vmatprep.subr.bf16.mxu0 %v671
        %771 = vmatpush1.bf16.msra.mxu0 %v670
        %772 = vmatprep.subr.bf16.mxu0 %v667
        %773 = vmatpush1.bf16.msra.mxu0 %v666
        %774 = vmatprep.subr.bf16.mxu0 %v663
        %775 = vmatpush1.bf16.msra.mxu0 %v662
        %776 = vmatprep.subr.bf16.mxu0 %v659
        %777 = vmatpush1.bf16.msra.mxu0 %v658
        %778 = vmatprep.subr.bf16.mxu0 %v655
        %779 = vmatpush1.bf16.msra.mxu0 %v654
        %780 = vmatprep.subr.bf16.mxu0 %v651
        %781 = vmatpush1.bf16.msra.mxu0 %v650
        %782 = vmatprep.subr.bf16.mxu0 %v647
        %783 = vmatpush1.bf16.msra.mxu0 %v646
        %784 = vmatprep.subr.bf16.mxu0 %v643
        %785 = vmatpush1.bf16.msra.mxu0 %v642
        %786 = vmatprep.subr.bf16.mxu0 %v703
        %787 = vmatpush2.bf16.msra.mxu0 %v702
        %788 = vmatprep.subr.bf16.mxu0 %v699
        %789 = vmatpush2.bf16.msra.mxu0 %v698
        %790 = vmatprep.subr.bf16.mxu0 %v695
        %791 = vmatpush2.bf16.msra.mxu0 %v694
        %792 = vmatprep.subr.bf16.mxu0 %v691
        %793 = vmatpush2.bf16.msra.mxu0 %v690
        %794 = vmatprep.subr.bf16.mxu0 %v687
        %795 = vmatpush2.bf16.msra.mxu0 %v686
        %796 = vmatprep.subr.bf16.mxu0 %v683
        %797 = vmatpush2.bf16.msra.mxu0 %v682
        %798 = vmatprep.subr.bf16.mxu0 %v679
        %799 = vmatpush2.bf16.msra.mxu0 %v678
        %800 = vmatprep.subr.bf16.mxu0 %v675
        %801 = vmatpush2.bf16.msra.mxu0 %v674
        %802 = vmatprep.mubr.bf16.mxu0 %v447
        %803 = vmatmul.mubr.bf16.gmra.mxu0 %v440
        %v804 = vpop.f32.mrf.mxu0
        %v805 = vadd.f32 %v408, %v804
        %v806 = vpop.f32.mrf.mxu0
        %v807 = vadd.f32 %v412, %v806
        %v808 = vpop.f32.mrf.mxu0
        %v809 = vpop.f32.mrf.mxu0
        %810 = vdwg.mxu0
        %811 = vmatprep.subr.bf16.mxu0 %v673
        %812 = vmatpush1.bf16.msra.mxu0 %v672
        %813 = vmatprep.subr.bf16.mxu0 %v669
        %814 = vmatpush1.bf16.msra.mxu0 %v668
        %815 = vmatprep.subr.bf16.mxu0 %v665
        %816 = vmatpush1.bf16.msra.mxu0 %v664
        %817 = vmatprep.subr.bf16.mxu0 %v661
        %818 = vmatpush1.bf16.msra.mxu0 %v660
        %819 = vmatprep.subr.bf16.mxu0 %v657
        %820 = vmatpush1.bf16.msra.mxu0 %v656
        %821 = vmatprep.subr.bf16.mxu0 %v653
        %822 = vmatpush1.bf16.msra.mxu0 %v652
        %823 = vmatprep.subr.bf16.mxu0 %v649
        %824 = vmatpush1.bf16.msra.mxu0 %v648
        %825 = vmatprep.subr.bf16.mxu0 %v645
        %826 = vmatpush1.bf16.msra.mxu0 %v644
        %827 = vmatprep.subr.bf16.mxu0 %v705
        %828 = vmatpush2.bf16.msra.mxu0 %v704
        %829 = vmatprep.subr.bf16.mxu0 %v701
        %830 = vmatpush2.bf16.msra.mxu0 %v700
        %831 = vmatprep.subr.bf16.mxu0 %v697
        %832 = vmatpush2.bf16.msra.mxu0 %v696
        %833 = vmatprep.subr.bf16.mxu0 %v693
        %834 = vmatpush2.bf16.msra.mxu0 %v692
        %835 = vmatprep.subr.bf16.mxu0 %v689
        %836 = vmatpush2.bf16.msra.mxu0 %v688
        %837 = vmatprep.subr.bf16.mxu0 %v685
        %838 = vmatpush2.bf16.msra.mxu0 %v684
        %839 = vmatprep.subr.bf16.mxu0 %v681
        %840 = vmatpush2.bf16.msra.mxu0 %v680
        %841 = vmatprep.subr.bf16.mxu0 %v677
        %842 = vmatpush2.bf16.msra.mxu0 %v676
        %843 = vmatprep.mubr.bf16.mxu0 %v447
        %844 = vmatmul.mubr.bf16.gmra.mxu0 %v440
        %v845 = vpop.f32.mrf.mxu0
        %v846 = vadd.f32 %v416, %v845
        %v847 = vpop.f32.mrf.mxu0
        %v848 = vadd.f32 %v420, %v847
        %v849 = vpop.f32.mrf.mxu0
        %v850 = vpop.f32.mrf.mxu0
        %851 = vdwg.mxu0
        %v856 = vcombine.low %v805, %v807
        %v857 = vcombine.low %v846, %v848
        %v859 = vunpack.c.l.s4 1983009808
        %v860 = vunpack.c.0.s8 %v859
        %v861 = vlaneseq
        %v862 = vshrl.u32 %v861, 7
        %v863 = vsub.s32 %v860, %v862
        %v864 = vrot.slane %v856, %v863
        %v866 = vunpack.c.l.s4 1983009808
        %v867 = vunpack.c.0.s8 %v866
        %v868 = vlaneseq
        %v869 = vshrl.u32 %v868, 7
        %v870 = vsub.s32 %v867, %v869
        %v871 = vrot.slane %v857, %v870
        %v872 = vcombine.low %v864, %v871
        %874 = vst [vmem:[%s336] sm:$0xff] %v872
        %s875 = smul.u32 4, %s14
        %p876 = scmp.lt.s32.totalorder %s875, 7
        %s877 = scalar_select %p876, %s875, 7
        %s878 = smul.addr %s877, 2
        %s879 = scalar_lea.vmem %s3, %s878
        // Predicated region
        $region56: #{decoder_forward.3} parent=50 // pred_check
          %p880 = pneg %p105
        $region57: #{decoder_forward.3} parent=50 // pred_check_branch
          %882 = sbr.rel (%p880) target = $region59
        $region58: #{decoder_forward.3} parent=50 // pred_region
          %s883 = smul.u32 4, %s14
        $region59: #{decoder_forward.3} parent=50 // pred_fallthru
          _
      $region51: #{decoder_forward.3} parent=5 // pred_fallthru
        _
      %p884 = scmp.le.s32.totalorder 2, %s9
      // Predicated region
      $region60: #{decoder_forward.3} parent=5 // pred_check
        %p885 = pneg %p884
      $region61: #{decoder_forward.3} parent=5 // pred_check_branch
        %887 = sbr.rel (%p885) target = $region63
      $region62: #{decoder_forward.3} parent=5 // pred_region
        %s888 = ssub.s32 %s9, 2
        // Predicated region
        $region64: #{decoder_forward.3} parent=62 // pred_check
          %p889 = pneg %p111
        $region65: #{decoder_forward.3} parent=62 // pred_check_branch
          %891 = sbr.rel (%p889) target = $region67
        $region66: #{decoder_forward.3} parent=62 // pred_region
          %s892 = smul.u32 4, %s15
          %p893 = scmp.lt.s32.totalorder %s892, 7
          %s894 = scalar_select %p893, %s892, 7
          %s895 = smul.addr %s894, 2
          %s896 = scalar_lea.vmem %s3, %s895
        $region67: #{decoder_forward.3} parent=62 // pred_fallthru
          _
      $region63: #{decoder_forward.3} parent=5 // pred_fallthru
        _
    $region6: #{decoder_forward.3} parent=1 // loop_footer
      %s13 = sadd.s32 1, %s9
    $region7: #{decoder_forward.3} parent=1 // loop_footer_branch
      %8 = sbr.rel target = $region3
    $region8: #{decoder_forward.3} parent=1 // loop_exit
      _

// kernel: decoder_forward.2
$region0: #{decoder_forward.2}
  #allocation0 [shape = 'u32[]', space=smem, size = 0x4, offset = 0x4, fixed_abs, tag = 'smem constant byte address 0x4 - core index']
  #allocation1 [shape = 'u32[144,128]{1,0:T(1,128)}', space=vmem, size = 0x12000, scoped, tag = 'internal scratch']
  %s0 = inlined_call_operand.vmem [shape: f32[2,32], index: 0, kind: input, shape index: {}]
  %s1 = inlined_call_operand.vmem [shape: f32[2,128], index: 1, kind: input, shape index: {}]
  %s2 = inlined_call_operand.vmem [shape: f32[2,8,128], index: 2, kind: input, shape index: {}]
  %s3 = inlined_call_operand.vmem [shape: f32[2,8,128], index: 3, kind: input, shape index: {}]
  %s4 = inlined_call_operand.vmem [shape: f32[128,128], index: 4, kind: input, shape index: {}]
  %s5 = inlined_call_operand.hbm [shape: f32[1,128], index: 5, kind: input, shape index: {}]
  %s6 = inlined_call_operand.hbm [shape: f32[32,384], index: 6, kind: input, shape index: {}]
  %s7 = inlined_call_operand.vmem [shape: f32[128,384], index: 7, kind: input, shape index: {}]
  %s8 = inlined_call_operand.hbm [shape: f32[1,384], index: 8, kind: input, shape index: {}]
  %s9 = inlined_call_operand.hbm [shape: f32[128,384], index: 9, kind: input, shape index: {}]
  %s10 = inlined_call_operand.hbm [shape: f32[1,384], index: 10, kind: input, shape index: {}]
  %s11 = inlined_call_operand.vmem [shape: f32[2,128], index: 11, kind: output, shape index: {0}]
  %s12 = inlined_call_operand.vmem [shape: bf16[2,256], index: 12, kind: output, shape index: {1}]
  %s13 = inlined_call_operand.hbm [shape: f32[2,8], index: 13, kind: output, shape index: {2}]
  %14 = xla_tuple %s11, %s12, %s13
  %s15 = sld [smem:[#allocation0]]
  $region90: #{decoder_forward.2} parent=0
    _
  %s17 = ssub.s32 1, %s15
  %s18 = scalar_select 0, %s17, %s15
  $region1: #{decoder_forward.2} parent=0
    #allocation2 [shape = 'u8[512]{0}', space=vmem, size = 0x400, scoped, tag = 'input window, operand 5, single buffered']
    #allocation3 [shape = 's32[1]{0}', space=sflag, size = 0x4, scoped, tag = 'scoped memory for decoder_forward.2']
    #allocation4 [shape = 's32[1]{0}', space=sflag, size = 0x4, scoped, tag = 'scoped memory for decoder_forward.2']
    #allocation5 [shape = 'u8[49152]{0}', space=vmem, size = 0xc000, scoped, tag = 'input window, operand 6, single buffered']
    #allocation6 [shape = 's32[1]{0}', space=sflag, size = 0x4, scoped, tag = 'scoped memory for decoder_forward.2']
    #allocation7 [shape = 'u8[1536]{0}', space=vmem, size = 0x800, scoped, tag = 'input window, operand 8, single buffered']
    #allocation8 [shape = 'u8[196608]{0}', space=vmem, size = 0x30000, scoped, tag = 'input window, operand 9, single buffered']
    #allocation9 [shape = 's32[1]{0}', space=sflag, size = 0x4, scoped, tag = 'scoped memory for decoder_forward.2']
    #allocation10 [shape = 'u8[1536]{0}', space=vmem, size = 0x800, scoped, tag = 'input window, operand 10, single buffered']
    #allocation11 [shape = 'u8[1024]{0}', space=vmem, size = 0x400, scoped, tag = 'output window, operand 2, single buffered']
    %19 = vsyncpa [#allocation3], 0
    %20 = vsyncpa [#allocation6], 0
    %21 = vsyncpa [#allocation9], 0
    %22 = vsyncpa [#allocation4], 0
    // Predicated region
    $region2: #{decoder_forward.2} parent=1 // pred_check
      _
    $region3: #{decoder_forward.2} parent=1 // pred_check_branch
      %24 = sbr.rel (0) target = $region5
    $region4: #{decoder_forward.2} parent=1 // pred_region
      _
    $region5: #{decoder_forward.2} parent=1 // pred_fallthru
      _
    // Predicated region
    $region6: #{decoder_forward.2} parent=1 // pred_check
      _
    $region7: #{decoder_forward.2} parent=1 // pred_check_branch
      %26 = sbr.rel (0) target = $region9
    $region8: #{decoder_forward.2} parent=1 // pred_region
      _
    $region9: #{decoder_forward.2} parent=1 // pred_fallthru
      _
    // Predicated region
    $region10: #{decoder_forward.2} parent=1 // pred_check
      _
    $region11: #{decoder_forward.2} parent=1 // pred_check_branch
      %28 = sbr.rel (0) target = $region13
    $region12: #{decoder_forward.2} parent=1 // pred_region
      _
    $region13: #{decoder_forward.2} parent=1 // pred_fallthru
      _
    // Predicated region
    $region14: #{decoder_forward.2} parent=1 // pred_check
      _
    $region15: #{decoder_forward.2} parent=1 // pred_check_branch
      %30 = sbr.rel (0) target = $region17
    $region16: #{decoder_forward.2} parent=1 // pred_region
      _
    $region17: #{decoder_forward.2} parent=1 // pred_fallthru
      _
    // Predicated region
    $region18: #{decoder_forward.2} parent=1 // pred_check
      _
    $region19: #{decoder_forward.2} parent=1 // pred_check_branch
      %32 = sbr.rel (0) target = $region21
    $region20: #{decoder_forward.2} parent=1 // pred_region
      _
    $region21: #{decoder_forward.2} parent=1 // pred_fallthru
      _
    // Predicated region
    $region22: #{decoder_forward.2} parent=1 // pred_check
      _
    $region23: #{decoder_forward.2} parent=1 // pred_check_branch
      %34 = sbr.rel (0) target = $region25
    $region24: #{decoder_forward.2} parent=1 // pred_region
      %s36 = ssub.s32 16, 16
      %37 = vsyncadd [#allocation3], %s36
      %s39 = sshll.u32 [#allocation2], 4
      %s40 = int_to_ptr.vmem [resolvable:$true] %s39
      %42 = dma.hbm_to_vmem [thread:$0]  %s5, 16, %s40, [#allocation3]
    $region25: #{decoder_forward.2} parent=1 // pred_fallthru
      _
    // Predicated region
    $region26: #{decoder_forward.2} parent=1 // pred_check
      _
    $region27: #{decoder_forward.2} parent=1 // pred_check_branch
      %44 = sbr.rel (0) target = $region29
    $region28: #{decoder_forward.2} parent=1 // pred_region
      %s46 = ssub.s32 1536, 1536
      %47 = vsyncadd [#allocation6], %s46
      %s48 = sshll.u32 [#allocation5], 4
      %s49 = int_to_ptr.vmem [resolvable:$true] %s48
      %54 = dma.hbm_to_vmem [thread:$0]  %s6, 1536, %s49, [#allocation6], 384, 384, 24
    $region29: #{decoder_forward.2} parent=1 // pred_fallthru
      _
    // Predicated region
    $region30: #{decoder_forward.2} parent=1 // pred_check
      _
    $region31: #{decoder_forward.2} parent=1 // pred_check_branch
      %56 = sbr.rel (0) target = $region33
    $region32: #{decoder_forward.2} parent=1 // pred_region
      _
    $region33: #{decoder_forward.2} parent=1 // pred_fallthru
      _
    // Predicated region
    $region34: #{decoder_forward.2} parent=1 // pred_check
      _
    $region35: #{decoder_forward.2} parent=1 // pred_check_branch
      %58 = sbr.rel (0) target = $region37
    $region36: #{decoder_forward.2} parent=1 // pred_region
      %s60 = ssub.s32 48, 48
      %61 = vsyncadd [#allocation6], %s60
      %s63 = sshll.u32 [#allocation7], 4
      %s64 = int_to_ptr.vmem [resolvable:$true] %s63
      %66 = dma.hbm_to_vmem [thread:$0]  %s8, 48, %s64, [#allocation6]
    $region37: #{decoder_forward.2} parent=1 // pred_fallthru
      _
    // Predicated region
    $region38: #{decoder_forward.2} parent=1 // pred_check
      _
    $region39: #{decoder_forward.2} parent=1 // pred_check_branch
      %68 = sbr.rel (0) target = $region41
    $region40: #{decoder_forward.2} parent=1 // pred_region
      %s70 = ssub.s32 6144, 6144
      %71 = vsyncadd [#allocation9], %s70
      %s72 = sshll.u32 [#allocation8], 4
      %s73 = int_to_ptr.vmem [resolvable:$true] %s72
      %78 = dma.hbm_to_vmem [thread:$0]  %s9, 6144, %s73, [#allocation9], 384, 384, 24
    $region41: #{decoder_forward.2} parent=1 // pred_fallthru
      _
    // Predicated region
    $region42: #{decoder_forward.2} parent=1 // pred_check
      _
    $region43: #{decoder_forward.2} parent=1 // pred_check_branch
      %80 = sbr.rel (0) target = $region45
    $region44: #{decoder_forward.2} parent=1 // pred_region
      %s82 = ssub.s32 48, 48
      %83 = vsyncadd [#allocation9], %s82
      %s85 = sshll.u32 [#allocation10], 4
      %s86 = int_to_ptr.vmem [resolvable:$true] %s85
      %88 = dma.hbm_to_vmem [thread:$0]  %s10, 48, %s86, [#allocation9]
    $region45: #{decoder_forward.2} parent=1 // pred_fallthru
      _
    // Predicated region
    $region46: #{decoder_forward.2} parent=1 // pred_check
      _
    $region47: #{decoder_forward.2} parent=1 // pred_check_branch
      %90 = sbr.rel (0) target = $region49
    $region48: #{decoder_forward.2} parent=1 // pred_region
      %91 = dma.done [#allocation3], 16
    $region49: #{decoder_forward.2} parent=1 // pred_fallthru
      _
    // Predicated region
    $region50: #{decoder_forward.2} parent=1 // pred_check
      _
    $region51: #{decoder_forward.2} parent=1 // pred_check_branch
      %93 = sbr.rel (0) target = $region53
    $region52: #{decoder_forward.2} parent=1 // pred_region
      %94 = dma.done [#allocation6], 1536
    $region53: #{decoder_forward.2} parent=1 // pred_fallthru
      _
    // Predicated region
    $region54: #{decoder_forward.2} parent=1 // pred_check
      _
    $region55: #{decoder_forward.2} parent=1 // pred_check_branch
      %96 = sbr.rel (0) target = $region57
    $region56: #{decoder_forward.2} parent=1 // pred_region
      %97 = dma.done [#allocation6], 48
    $region57: #{decoder_forward.2} parent=1 // pred_fallthru
      _
    // Predicated region
    $region58: #{decoder_forward.2} parent=1 // pred_check
      _
    $region59: #{decoder_forward.2} parent=1 // pred_check_branch
      %99 = sbr.rel (0) target = $region61
    $region60: #{decoder_forward.2} parent=1 // pred_region
      %100 = dma.done [#allocation9], 6144
    $region61: #{decoder_forward.2} parent=1 // pred_fallthru
      _
    // Predicated region
    $region62: #{decoder_forward.2} parent=1 // pred_check
      _
    $region63: #{decoder_forward.2} parent=1 // pred_check_branch
      %102 = sbr.rel (0) target = $region65
    $region64: #{decoder_forward.2} parent=1 // pred_region
      %103 = dma.done [#allocation9], 48
    $region65: #{decoder_forward.2} parent=1 // pred_fallthru
      _
    %v104 = vld [vmem:[%s1] sm:$0x3]
    %v105 = vld [vmem:[%s0] sm:$0x3]
    %v106 = vld [vmem:[%s2] sm:$0xff]
    %v107 = vld [vmem:[%s2 + $0x8] sm:$0xff]
    %v108 = vld [vmem:[%s4] sm:$0xff]
    %v109 = vld [vmem:[%s4 + $0x8] sm:$0xff]
    %v110 = vld [vmem:[%s4 + $0x10] sm:$0xff]
    %v111 = vld [vmem:[%s4 + $0x18] sm:$0xff]
    %v112 = vld [vmem:[%s4 + $0x20] sm:$0xff]
    %v113 = vld [vmem:[%s4 + $0x28] sm:$0xff]
    %v114 = vld [vmem:[%s4 + $0x30] sm:$0xff]
    %v115 = vld [vmem:[%s4 + $0x38] sm:$0xff]
    %v116 = vld [vmem:[%s4 + $0x40] sm:$0xff]
    %v117 = vld [vmem:[%s4 + $0x48] sm:$0xff]
    %v118 = vld [vmem:[%s4 + $0x50] sm:$0xff]
    %v119 = vld [vmem:[%s4 + $0x58] sm:$0xff]
    %v120 = vld [vmem:[%s4 + $0x60] sm:$0xff]
    %v121 = vld [vmem:[%s4 + $0x68] sm:$0xff]
    %v122 = vld [vmem:[%s4 + $0x70] sm:$0xff]
    %v123 = vld [vmem:[%s4 + $0x78] sm:$0xff]
    %124 = vmatprep.subr.mxu0 0.0
    %125 = vmatpush1.msra.mxu0 %v123
    %126 = vmatprep.subr.mxu0 0.0
    %127 = vmatpush1.msra.mxu0 %v122
    %128 = vmatprep.subr.mxu0 0.0
    %129 = vmatpush1.msra.mxu0 %v121
    %130 = vmatprep.subr.mxu0 0.0
    %131 = vmatpush1.msra.mxu0 %v120
    %132 = vmatprep.subr.mxu0 0.0
    %133 = vmatpush1.msra.mxu0 %v119
    %134 = vmatprep.subr.mxu0 0.0
    %135 = vmatpush1.msra.mxu0 %v118
    %136 = vmatprep.subr.mxu0 0.0
    %137 = vmatpush1.msra.mxu0 %v117
    %138 = vmatprep.subr.mxu0 0.0
    %139 = vmatpush1.msra.mxu0 %v116
    %140 = vmatprep.subr.mxu0 0.0
    %141 = vmatpush1.msra.mxu0 %v115
    %142 = vmatprep.subr.mxu0 0.0
    %143 = vmatpush1.msra.mxu0 %v114
    %144 = vmatprep.subr.mxu0 0.0
    %145 = vmatpush1.msra.mxu0 %v113
    %146 = vmatprep.subr.mxu0 0.0
    %147 = vmatpush1.msra.mxu0 %v112
    %148 = vmatprep.subr.mxu0 0.0
    %149 = vmatpush1.msra.mxu0 %v111
    %150 = vmatprep.subr.mxu0 0.0
    %151 = vmatpush1.msra.mxu0 %v110
    %152 = vmatprep.subr.mxu0 0.0
    %153 = vmatpush1.msra.mxu0 %v109
    %154 = vmatprep.subr.mxu0 0.0
    %155 = vmatpush1.msra.mxu0 %v108
    %156 = vmatprep.subr.mxu0 0.0
    %157 = vmatpush2.msra.mxu0 0.0
    %158 = vmatprep.subr.mxu0 0.0
    %159 = vmatpush2.msra.mxu0 0.0
    %160 = vmatprep.subr.mxu0 0.0
    %161 = vmatpush2.msra.mxu0 0.0
    %162 = vmatprep.subr.mxu0 0.0
    %163 = vmatpush2.msra.mxu0 0.0
    %164 = vmatprep.subr.mxu0 0.0
    %165 = vmatpush2.msra.mxu0 0.0
    %166 = vmatprep.subr.mxu0 0.0
    %167 = vmatpush2.msra.mxu0 0.0
    %168 = vmatprep.subr.mxu0 0.0
    %169 = vmatpush2.msra.mxu0 0.0
    %170 = vmatprep.subr.mxu0 0.0
    %171 = vmatpush2.msra.mxu0 0.0
    %172 = vmatprep.subr.mxu0 0.0
    %173 = vmatpush2.msra.mxu0 0.0
    %174 = vmatprep.subr.mxu0 0.0
    %175 = vmatpush2.msra.mxu0 0.0
    %176 = vmatprep.subr.mxu0 0.0
    %177 = vmatpush2.msra.mxu0 0.0
    %178 = vmatprep.subr.mxu0 0.0
    %179 = vmatpush2.msra.mxu0 0.0
    %180 = vmatprep.subr.mxu0 0.0
    %181 = vmatpush2.msra.mxu0 0.0
    %182 = vmatprep.subr.mxu0 0.0
    %183 = vmatpush2.msra.mxu0 0.0
    %184 = vmatprep.subr.mxu0 0.0
    %185 = vmatpush2.msra.mxu0 0.0
    %186 = vmatprep.subr.mxu0 0.0
    %187 = vmatpush2.msra.mxu0 0.0
    %188 = vmatprep.mubr.f32.mxu0 0.0
    %189 = vmatmul.mubr.f32.gmra.mxu0 %v104
    %v190 = vpop.f32.mrf.mxu0
    %v191 = vadd.f32 0.0, %v190
    %v192 = vpop.f32.mrf.mxu0
    %193 = vdwg.mxu0
    %v194 = vld [vmem:[%s3] sm:$0xff]
    %v195 = vld [vmem:[%s3 + $0x8] sm:$0xff]
    %v198 = vunpack.c.l.s4 1966171168
    %v199 = vunpack.c.0.s8 %v198
    %v200 = vlaneseq
    %v201 = vshrl.u32 %v200, 7
    %v202 = vsub.s32 %v199, %v201
    %v203 = vrot.slane %v191, %v202
    %v204 = vcombine.high %v203, %v203
    %v206 = vunpack.c.l.s4 1966171168
    %v207 = vunpack.c.0.s8 %v206
    %v208 = vlaneseq
    %v209 = vshrl.u32 %v208, 7
    %v210 = vsub.s32 %v207, %v209
    %v211 = vrot.slane %v203, %v210
    %v213 = vunpack.c.l.s4 1966171168
    %v214 = vunpack.c.0.s8 %v213
    %v215 = vlaneseq
    %v216 = vshrl.u32 %v215, 7
    %v217 = vsub.s32 %v214, %v216
    %v218 = vrot.slane %v204, %v217
    %v219 = vlaneseq
    %v220 = vshrl.u32 %v219, 7
    %v221 = vsub.s32 0, %v220
    %v222 = vrot.slane %v211, %v221
    %v223 = vlaneseq
    %v224 = vshrl.u32 %v223, 7
    %v225 = vsub.s32 0, %v224
    %v226 = vrot.slane %v218, %v225
    %v229 = vadd.f32 %v194, %v222
    %v230 = vadd.f32 %v195, %v226
    %v231 = vtanh.pop %v229
    %v232 = vtanh.pop %v230
    %v233 = vld [vmem:[#allocation2] sm:$0x1]
    %v235 = vlaneseq
    %v236 = vshrl.u32 %v235, 7
    %v237 = vsub.s32 0, %v236
    %v238 = vrot.slane %v233, %v237
    %v240 = vmul.f32 %v231, %v238
    %v241 = vmul.f32 %v232, %v238
    %242 = vadd.xlane.f32.xlu0 %v240
    %v243 = vpop.xlane.xlu0 %242
    %244 = vadd.xlane.f32.xlu0 %v241
    %v245 = vpop.xlane.xlu0 %244
    %v248 = vlaneseq
    %v249 = vand.u32 %v248, 127
    %v250 = vlaneseq
    %v251 = vshrl.u32 %v250, 7
    %v252 = vsub.s32 %v249, %v251
    %v253 = vrot.slane %v243, %v252
    %v254 = vlaneseq
    %v255 = vshrl.u32 %v254, 7
    %v256 = vsub.s32 %v249, %v255
    %v257 = vrot.slane %v245, %v256
    %vm258 = vcmask 1041409
    %v259 = vsel %vm258, %v257, %v253
    %vm261 = vcmask 58368
    %v262 = vsel %vm261, %v259, -inf
    %263 = vmax.xlane.f32.xlu0 %v262
    %v264 = vpop.xlane.xlu0 %263
    %v266 = vlaneseq
    %v267 = vshrl.u32 %v266, 7
    %v268 = vsub.s32 0, %v267
    %v269 = vrot.slane %v264, %v268
    %v270 = vlaneseq
    %v271 = vshrl.u32 %v270, 7
    %v272 = vsub.s32 1, %v271
    %v273 = vrot.slane %v264, %v272
    %v276 = vsub.f32 %v243, %v269
    %v277 = vsub.f32 %v245, %v273
    %v278 = vmul.f32 %v276, 1.442695
    %v279 = vpow.pop %v278
    %v280 = vmul.f32 %v277, 1.442695
    %v281 = vpow.pop %v280
    %284 = vset.pattern.permute.xlu0 0
    %285 = vperm.xlu0 %284, %v279
    %v286 = vpop.permute.xlu0 %285
    %287 = vset.pattern.permute.xlu0 0
    %288 = vperm.xlu0 %287, %v281
    %v289 = vpop.permute.xlu0 %288
    %v290 = vlaneseq
    %v291 = vshrl.u32 %v290, 7
    %v292 = vsub.s32 %v249, %v291
    %v293 = vrot.slane %v286, %v292
    %v294 = vlaneseq
    %v295 = vshrl.u32 %v294, 7
    %v296 = vsub.s32 %v249, %v295
    %v297 = vrot.slane %v289, %v296
    %v298 = vsel %vm258, %v297, %v293
    %v300 = vsel %vm261, %v298, 0.0
    %301 = vadd.xlane.f32.xlu0 %v300
    %v302 = vpop.xlane.xlu0 %301
    %v303 = vrcp.pop %v302
    %v305 = vlaneseq
    %v306 = vshrl.u32 %v305, 7
    %v307 = vsub.s32 0, %v306
    %v308 = vrot.slane %v303, %v307
    %v309 = vlaneseq
    %v310 = vshrl.u32 %v309, 7
    %v311 = vsub.s32 1, %v310
    %v312 = vrot.slane %v303, %v311
    %v315 = vmul.f32 %v279, %v308
    %v316 = vmul.f32 %v281, %v312
    %319 = vset.pattern.permute.xlu0 0
    %320 = vperm.xlu0 %319, %v315
    %v321 = vpop.permute.xlu0 %320
    %322 = vset.pattern.permute.xlu0 0
    %323 = vperm.xlu0 %322, %v316
    %v324 = vpop.permute.xlu0 %323
    %v325 = vlaneseq
    %v326 = vshrl.u32 %v325, 7
    %v327 = vsub.s32 %v249, %v326
    %v328 = vrot.slane %v321, %v327
    %v329 = vlaneseq
    %v330 = vshrl.u32 %v329, 7
    %v331 = vsub.s32 %v249, %v330
    %v332 = vrot.slane %v324, %v331
    %v333 = vsel %vm258, %v332, %v328
    %335 = vst.msk [vmem:[#allocation11] sm:$0x3] %vm261, %v333
    %v338 = vmul.f32 %v321, %v106
    %v339 = vmul.f32 %v324, %v107
    %v340 = vrot.slane %v338, 4
    %v341 = vadd.f32 %v338, %v340
    %v342 = vrot.slane %v341, 2
    %v343 = vadd.f32 %v341, %v342
    %v344 = vrot.slane %v343, 1
    %v345 = vadd.f32 %v343, %v344
    %v346 = vrot.slane %v339, 4
    %v347 = vadd.f32 %v339, %v346
    %v348 = vrot.slane %v347, 2
    %v349 = vadd.f32 %v347, %v348
    %v350 = vrot.slane %v349, 1
    %v351 = vadd.f32 %v349, %v350
    %v352 = vld [vmem:[#allocation5] sm:$0xff]
    %v353 = vld [vmem:[#allocation5 + $0x8] sm:$0xff]
    %v354 = vld [vmem:[#allocation5 + $0x10] sm:$0xff]
    %v355 = vld [vmem:[#allocation5 + $0x18] sm:$0xff]
    %v356 = vld [vmem:[#allocation5 + $0x20] sm:$0xff]
    %v357 = vld [vmem:[#allocation5 + $0x28] sm:$0xff]
    %v358 = vld [vmem:[#allocation5 + $0x30] sm:$0xff]
    %v359 = vld [vmem:[#allocation5 + $0x38] sm:$0xff]
    %v360 = vld [vmem:[#allocation5 + $0x40] sm:$0xff]
    %v361 = vld [vmem:[#allocation5 + $0x48] sm:$0xff]
    %v362 = vld [vmem:[#allocation5 + $0x50] sm:$0xff]
    %v363 = vld [vmem:[#allocation5 + $0x58] sm:$0xff]
    %v364 = vld [vmem:[%s7] sm:$0xff]
    %v365 = vld [vmem:[%s7 + $0x8] sm:$0xff]
    %v366 = vld [vmem:[%s7 + $0x10] sm:$0xff]
    %v367 = vld [vmem:[%s7 + $0x18] sm:$0xff]
    %v368 = vld [vmem:[%s7 + $0x20] sm:$0xff]
    %v369 = vld [vmem:[%s7 + $0x28] sm:$0xff]
    %v370 = vld [vmem:[%s7 + $0x30] sm:$0xff]
    %v371 = vld [vmem:[%s7 + $0x38] sm:$0xff]
    %v372 = vld [vmem:[%s7 + $0x40] sm:$0xff]
    %v373 = vld [vmem:[%s7 + $0x48] sm:$0xff]
    %v374 = vld [vmem:[%s7 + $0x50] sm:$0xff]
    %v375 = vld [vmem:[%s7 + $0x58] sm:$0xff]
    %v376 = vld [vmem:[%s7 + $0x60] sm:$0xff]
    %v377 = vld [vmem:[%s7 + $0x68] sm:$0xff]
    %v378 = vld [vmem:[%s7 + $0x70] sm:$0xff]
    %v379 = vld [vmem:[%s7 + $0x78] sm:$0xff]
    %v380 = vld [vmem:[%s7 + $0x80] sm:$0xff]
    %v381 = vld [vmem:[%s7 + $0x88] sm:$0xff]
    %v382 = vld [vmem:[%s7 + $0x90] sm:$0xff]
    %v383 = vld [vmem:[%s7 + $0x98] sm:$0xff]
    %v384 = vld [vmem:[%s7 + $0xa0] sm:$0xff]
    %v385 = vld [vmem:[%s7 + $0xa8] sm:$0xff]
    %v386 = vld [vmem:[%s7 + $0xb0] sm:$0xff]
    %v387 = vld [vmem:[%s7 + $0xb8] sm:$0xff]
    %v388 = vld [vmem:[%s7 + $0xc0] sm:$0xff]
    %v389 = vld [vmem:[%s7 + $0xc8] sm:$0xff]
    %v390 = vld [vmem:[%s7 + $0xd0] sm:$0xff]
    %v391 = vld [vmem:[%s7 + $0xd8] sm:$0xff]
    %v392 = vld [vmem:[%s7 + $0xe0] sm:$0xff]
    %v393 = vld [vmem:[%s7 + $0xe8] sm:$0xff]
    %v394 = vld [vmem:[%s7 + $0xf0] sm:$0xff]
    %v395 = vld [vmem:[%s7 + $0xf8] sm:$0xff]
    %v396 = vld [vmem:[%s7 + $0x100] sm:$0xff]
    %v397 = vld [vmem:[%s7 + $0x108] sm:$0xff]
    %v398 = vld [vmem:[%s7 + $0x110] sm:$0xff]
    %v399 = vld [vmem:[%s7 + $0x118] sm:$0xff]
    %v400 = vld [vmem:[%s7 + $0x120] sm:$0xff]
    %v401 = vld [vmem:[%s7 + $0x128] sm:$0xff]
    %v402 = vld [vmem:[%s7 + $0x130] sm:$0xff]
    %v403 = vld [vmem:[%s7 + $0x138] sm:$0xff]
    %v404 = vld [vmem:[%s7 + $0x140] sm:$0xff]
    %v405 = vld [vmem:[%s7 + $0x148] sm:$0xff]
    %v406 = vld [vmem:[%s7 + $0x150] sm:$0xff]
    %v407 = vld [vmem:[%s7 + $0x158] sm:$0xff]
    %v408 = vld [vmem:[%s7 + $0x160] sm:$0xff]
    %v409 = vld [vmem:[%s7 + $0x168] sm:$0xff]
    %v410 = vld [vmem:[%s7 + $0x170] sm:$0xff]
    %v411 = vld [vmem:[%s7 + $0x178] sm:$0xff]
    %v414 = vsel %vm258, %v351, %v345
    %416 = vmatprep.subr.mxu0 %v410
    %417 = vmatpush1.msra.mxu0 %v409
    %418 = vmatprep.subr.mxu0 %v407
    %419 = vmatpush1.msra.mxu0 %v406
    %420 = vmatprep.subr.mxu0 %v404
    %421 = vmatpush1.msra.mxu0 %v403
    %422 = vmatprep.subr.mxu0 %v401
    %423 = vmatpush1.msra.mxu0 %v400
    %424 = vmatprep.subr.mxu0 %v398
    %425 = vmatpush1.msra.mxu0 %v397
    %426 = vmatprep.subr.mxu0 %v395
    %427 = vmatpush1.msra.mxu0 %v394
    %428 = vmatprep.subr.mxu0 %v392
    %429 = vmatpush1.msra.mxu0 %v391
    %430 = vmatprep.subr.mxu0 %v389
    %431 = vmatpush1.msra.mxu0 %v388
    %432 = vmatprep.subr.mxu0 %v386
    %433 = vmatpush1.msra.mxu0 %v385
    %434 = vmatprep.subr.mxu0 %v383
    %435 = vmatpush1.msra.mxu0 %v382
    %436 = vmatprep.subr.mxu0 %v380
    %437 = vmatpush1.msra.mxu0 %v379
    %438 = vmatprep.subr.mxu0 %v377
    %439 = vmatpush1.msra.mxu0 %v376
    %440 = vmatprep.subr.mxu0 %v374
    %441 = vmatpush1.msra.mxu0 %v373
    %442 = vmatprep.subr.mxu0 %v371
    %443 = vmatpush1.msra.mxu0 %v370
    %444 = vmatprep.subr.mxu0 %v368
    %445 = vmatpush1.msra.mxu0 %v367
    %446 = vmatprep.subr.mxu0 %v365
    %447 = vmatpush1.msra.mxu0 %v364
    %448 = vmatprep.subr.mxu0 0.0
    %449 = vmatpush2.msra.mxu0 0.0
    %450 = vmatprep.subr.mxu0 0.0
    %451 = vmatpush2.msra.mxu0 0.0
    %452 = vmatprep.subr.mxu0 0.0
    %453 = vmatpush2.msra.mxu0 0.0
    %454 = vmatprep.subr.mxu0 0.0
    %455 = vmatpush2.msra.mxu0 0.0
    %456 = vmatprep.subr.mxu0 0.0
    %457 = vmatpush2.msra.mxu0 0.0
    %458 = vmatprep.subr.mxu0 0.0
    %459 = vmatpush2.msra.mxu0 0.0
    %460 = vmatprep.subr.mxu0 0.0
    %461 = vmatpush2.msra.mxu0 0.0
    %462 = vmatprep.subr.mxu0 0.0
    %463 = vmatpush2.msra.mxu0 0.0
    %464 = vmatprep.subr.mxu0 0.0
    %465 = vmatpush2.msra.mxu0 0.0
    %466 = vmatprep.subr.mxu0 0.0
    %467 = vmatpush2.msra.mxu0 0.0
    %468 = vmatprep.subr.mxu0 0.0
    %469 = vmatpush2.msra.mxu0 0.0
    %470 = vmatprep.subr.mxu0 0.0
    %471 = vmatpush2.msra.mxu0 0.0
    %472 = vmatprep.subr.mxu0 0.0
    %473 = vmatpush2.msra.mxu0 0.0
    %474 = vmatprep.subr.mxu0 0.0
    %475 = vmatpush2.msra.mxu0 0.0
    %476 = vmatprep.subr.mxu0 0.0
    %477 = vmatpush2.msra.mxu0 0.0
    %478 = vmatprep.subr.mxu0 0.0
    %479 = vmatpush2.msra.mxu0 0.0
    %480 = vmatprep.mubr.f32.mxu0 0.0
    %481 = vmatmul.mubr.f32.gmra.mxu0 %v414
    %v482 = vpop.f32.mrf.mxu0
    %v483 = vadd.f32 0.0, %v482
    %v484 = vpop.f32.mrf.mxu0
    %v485 = vadd.f32 0.0, %v484
    %486 = vdwg.mxu0
    %487 = vmatprep.subr.mxu0 0.0
    %488 = vmatpush1.msra.mxu0 %v411
    %489 = vmatprep.subr.mxu0 0.0
    %490 = vmatpush1.msra.mxu0 %v408
    %491 = vmatprep.subr.mxu0 0.0
    %492 = vmatpush1.msra.mxu0 %v405
    %493 = vmatprep.subr.mxu0 0.0
    %494 = vmatpush1.msra.mxu0 %v402
    %495 = vmatprep.subr.mxu0 0.0
    %496 = vmatpush1.msra.mxu0 %v399
    %497 = vmatprep.subr.mxu0 0.0
    %498 = vmatpush1.msra.mxu0 %v396
    %499 = vmatprep.subr.mxu0 0.0
    %500 = vmatpush1.msra.mxu0 %v393
    %501 = vmatprep.subr.mxu0 0.0
    %502 = vmatpush1.msra.mxu0 %v390
    %503 = vmatprep.subr.mxu0 0.0
    %504 = vmatpush1.msra.mxu0 %v387
    %505 = vmatprep.subr.mxu0 0.0
    %506 = vmatpush1.msra.mxu0 %v384
    %507 = vmatprep.subr.mxu0 0.0
    %508 = vmatpush1.msra.mxu0 %v381
    %509 = vmatprep.subr.mxu0 0.0
    %510 = vmatpush1.msra.mxu0 %v378
    %511 = vmatprep.subr.mxu0 0.0
    %512 = vmatpush1.msra.mxu0 %v375
    %513 = vmatprep.subr.mxu0 0.0
    %514 = vmatpush1.msra.mxu0 %v372
    %515 = vmatprep.subr.mxu0 0.0
    %516 = vmatpush1.msra.mxu0 %v369
    %517 = vmatprep.subr.mxu0 0.0
    %518 = vmatpush1.msra.mxu0 %v366
    %519 = vmatprep.subr.mxu0 0.0
    %520 = vmatpush2.msra.mxu0 0.0
    %521 = vmatprep.subr.mxu0 0.0
    %522 = vmatpush2.msra.mxu0 0.0
    %523 = vmatprep.subr.mxu0 0.0
    %524 = vmatpush2.msra.mxu0 0.0
    %525 = vmatprep.subr.mxu0 0.0
    %526 = vmatpush2.msra.mxu0 0.0
    %527 = vmatprep.subr.mxu0 0.0
    %528 = vmatpush2.msra.mxu0 0.0
    %529 = vmatprep.subr.mxu0 0.0
    %530 = vmatpush2.msra.mxu0 0.0
    %531 = vmatprep.subr.mxu0 0.0
    %532 = vmatpush2.msra.mxu0 0.0
    %533 = vmatprep.subr.mxu0 0.0
    %534 = vmatpush2.msra.mxu0 0.0
    %535 = vmatprep.subr.mxu0 0.0
    %536 = vmatpush2.msra.mxu0 0.0
    %537 = vmatprep.subr.mxu0 0.0
    %538 = vmatpush2.msra.mxu0 0.0
    %539 = vmatprep.subr.mxu0 0.0
    %540 = vmatpush2.msra.mxu0 0.0
    %541 = vmatprep.subr.mxu0 0.0
    %542 = vmatpush2.msra.mxu0 0.0
    %543 = vmatprep.subr.mxu0 0.0
    %544 = vmatpush2.msra.mxu0 0.0
    %545 = vmatprep.subr.mxu0 0.0
    %546 = vmatpush2.msra.mxu0 0.0
    %547 = vmatprep.subr.mxu0 0.0
    %548 = vmatpush2.msra.mxu0 0.0
    %549 = vmatprep.subr.mxu0 0.0
    %550 = vmatpush2.msra.mxu0 0.0
    %551 = vmatprep.mubr.f32.mxu0 0.0
    %552 = vmatmul.mubr.f32.gmra.mxu0 %v414
    %v553 = vpop.f32.mrf.mxu0
    %v554 = vadd.f32 0.0, %v553
    %v555 = vpop.f32.mrf.mxu0
    %556 = vdwg.mxu0
    %vm557 = vcmask 261120
    %v559 = vsel %vm557, %v105, 0
    %561 = vmatprep.subr.mxu0 0.0
    %562 = vmatpush1.msra.mxu0 0.0
    %563 = vmatprep.subr.mxu0 0.0
    %564 = vmatpush1.msra.mxu0 0.0
    %565 = vmatprep.subr.mxu0 0.0
    %566 = vmatpush1.msra.mxu0 0.0
    %567 = vmatprep.subr.mxu0 0.0
    %568 = vmatpush1.msra.mxu0 0.0
    %569 = vmatprep.subr.mxu0 0.0
    %570 = vmatpush1.msra.mxu0 0.0
    %571 = vmatprep.subr.mxu0 0.0
    %572 = vmatpush1.msra.mxu0 0.0
    %573 = vmatprep.subr.mxu0 0.0
    %574 = vmatpush1.msra.mxu0 0.0
    %575 = vmatprep.subr.mxu0 0.0
    %576 = vmatpush1.msra.mxu0 0.0
    %577 = vmatprep.subr.mxu0 0.0
    %578 = vmatpush1.msra.mxu0 0.0
    %579 = vmatprep.subr.mxu0 0.0
    %580 = vmatpush1.msra.mxu0 0.0
    %581 = vmatprep.subr.mxu0 0.0
    %582 = vmatpush1.msra.mxu0 0.0
    %583 = vmatprep.subr.mxu0 0.0
    %584 = vmatpush1.msra.mxu0 0.0
    %585 = vmatprep.subr.mxu0 %v362
    %586 = vmatpush1.msra.mxu0 %v361
    %587 = vmatprep.subr.mxu0 %v359
    %588 = vmatpush1.msra.mxu0 %v358
    %589 = vmatprep.subr.mxu0 %v356
    %590 = vmatpush1.msra.mxu0 %v355
    %591 = vmatprep.subr.mxu0 %v353
    %592 = vmatpush1.msra.mxu0 %v352
    %593 = vmatprep.subr.mxu0 0.0
    %594 = vmatpush2.msra.mxu0 0.0
    %595 = vmatprep.subr.mxu0 0.0
    %596 = vmatpush2.msra.mxu0 0.0
    %597 = vmatprep.subr.mxu0 0.0
    %598 = vmatpush2.msra.mxu0 0.0
    %599 = vmatprep.subr.mxu0 0.0
    %600 = vmatpush2.msra.mxu0 0.0
    %601 = vmatprep.subr.mxu0 0.0
    %602 = vmatpush2.msra.mxu0 0.0
    %603 = vmatprep.subr.mxu0 0.0
    %604 = vmatpush2.msra.mxu0 0.0
    %605 = vmatprep.subr.mxu0 0.0
    %606 = vmatpush2.msra.mxu0 0.0
    %607 = vmatprep.subr.mxu0 0.0
    %608 = vmatpush2.msra.mxu0 0.0
    %609 = vmatprep.subr.mxu0 0.0
    %610 = vmatpush2.msra.mxu0 0.0
    %611 = vmatprep.subr.mxu0 0.0
    %612 = vmatpush2.msra.mxu0 0.0
    %613 = vmatprep.subr.mxu0 0.0
    %614 = vmatpush2.msra.mxu0 0.0
    %615 = vmatprep.subr.mxu0 0.0
    %616 = vmatpush2.msra.mxu0 0.0
    %617 = vmatprep.subr.mxu0 0.0
    %618 = vmatpush2.msra.mxu0 0.0
    %619 = vmatprep.subr.mxu0 0.0
    %620 = vmatpush2.msra.mxu0 0.0
    %621 = vmatprep.subr.mxu0 0.0
    %622 = vmatpush2.msra.mxu0 0.0
    %623 = vmatprep.subr.mxu0 0.0
    %624 = vmatpush2.msra.mxu0 0.0
    %625 = vmatprep.mubr.f32.mxu0 0.0
    %626 = vmatmul.mubr.f32.gmra.mxu0 %v559
    %v627 = vpop.f32.mrf.mxu0
    %v628 = vadd.f32 %v483, %v627
    %v629 = vpop.f32.mrf.mxu0
    %v630 = vadd.f32 %v485, %v629
    %631 = vdwg.mxu0
    %632 = vmatprep.subr.mxu0 0.0
    %633 = vmatpush1.msra.mxu0 0.0
    %634 = vmatprep.subr.mxu0 0.0
    %635 = vmatpush1.msra.mxu0 0.0
    %636 = vmatprep.subr.mxu0 0.0
    %637 = vmatpush1.msra.mxu0 0.0
    %638 = vmatprep.subr.mxu0 0.0
    %639 = vmatpush1.msra.mxu0 0.0
    %640 = vmatprep.subr.mxu0 0.0
    %641 = vmatpush1.msra.mxu0 0.0
    %642 = vmatprep.subr.mxu0 0.0
    %643 = vmatpush1.msra.mxu0 0.0
    %644 = vmatprep.subr.mxu0 0.0
    %645 = vmatpush1.msra.mxu0 0.0
    %646 = vmatprep.subr.mxu0 0.0
    %647 = vmatpush1.msra.mxu0 0.0
    %648 = vmatprep.subr.mxu0 0.0
    %649 = vmatpush1.msra.mxu0 0.0
    %650 = vmatprep.subr.mxu0 0.0
    %651 = vmatpush1.msra.mxu0 0.0
    %652 = vmatprep.subr.mxu0 0.0
    %653 = vmatpush1.msra.mxu0 0.0
    %654 = vmatprep.subr.mxu0 0.0
    %655 = vmatpush1.msra.mxu0 0.0
    %656 = vmatprep.subr.mxu0 0.0
    %657 = vmatpush1.msra.mxu0 %v363
    %658 = vmatprep.subr.mxu0 0.0
    %659 = vmatpush1.msra.mxu0 %v360
    %660 = vmatprep.subr.mxu0 0.0
    %661 = vmatpush1.msra.mxu0 %v357
    %662 = vmatprep.subr.mxu0 0.0
    %663 = vmatpush1.msra.mxu0 %v354
    %664 = vmatprep.subr.mxu0 0.0
    %665 = vmatpush2.msra.mxu0 0.0
    %666 = vmatprep.subr.mxu0 0.0
    %667 = vmatpush2.msra.mxu0 0.0
    %668 = vmatprep.subr.mxu0 0.0
    %669 = vmatpush2.msra.mxu0 0.0
    %670 = vmatprep.subr.mxu0 0.0
    %671 = vmatpush2.msra.mxu0 0.0
    %672 = vmatprep.subr.mxu0 0.0
    %673 = vmatpush2.msra.mxu0 0.0
    %674 = vmatprep.subr.mxu0 0.0
    %675 = vmatpush2.msra.mxu0 0.0
    %676 = vmatprep.subr.mxu0 0.0
    %677 = vmatpush2.msra.mxu0 0.0
    %678 = vmatprep.subr.mxu0 0.0
    %679 = vmatpush2.msra.mxu0 0.0
    %680 = vmatprep.subr.mxu0 0.0
    %681 = vmatpush2.msra.mxu0 0.0
    %682 = vmatprep.subr.mxu0 0.0
    %683 = vmatpush2.msra.mxu0 0.0
    %684 = vmatprep.subr.mxu0 0.0
    %685 = vmatpush2.msra.mxu0 0.0
    %686 = vmatprep.subr.mxu0 0.0
    %687 = vmatpush2.msra.mxu0 0.0
    %688 = vmatprep.subr.mxu0 0.0
    %689 = vmatpush2.msra.mxu0 0.0
    %690 = vmatprep.subr.mxu0 0.0
    %691 = vmatpush2.msra.mxu0 0.0
    %692 = vmatprep.subr.mxu0 0.0
    %693 = vmatpush2.msra.mxu0 0.0
    %694 = vmatprep.subr.mxu0 0.0
    %695 = vmatpush2.msra.mxu0 0.0
    %696 = vmatprep.mubr.f32.mxu0 0.0
    %697 = vmatmul.mubr.f32.gmra.mxu0 %v559
    %v698 = vpop.f32.mrf.mxu0
    %v699 = vadd.f32 %v554, %v698
    %v700 = vpop.f32.mrf.mxu0
    %701 = vdwg.mxu0
    %v702 = vld [vmem:[#allocation7] sm:$0x7]
    %v704 = vlaneseq
    %v705 = vshrl.u32 %v704, 7
    %v706 = vsub.s32 0, %v705
    %v707 = vrot.slane %v702, %v706
    %v708 = vlaneseq
    %v709 = vshrl.u32 %v708, 7
    %v710 = vsub.s32 1, %v709
    %v711 = vrot.slane %v702, %v710
    %v712 = vlaneseq
    %v713 = vshrl.u32 %v712, 7
    %v714 = vsub.s32 2, %v713
    %v715 = vrot.slane %v702, %v714
    %v719 = vadd.f32 %v628, %v707
    %v720 = vadd.f32 %v630, %v711
    %v721 = vadd.f32 %v699, %v715
    %v722 = vld [vmem:[#allocation8] sm:$0xff]
    %v723 = vld [vmem:[#allocation8 + $0x8] sm:$0xff]
    %v724 = vld [vmem:[#allocation8 + $0x10] sm:$0xff]
    %v725 = vld [vmem:[#allocation8 + $0x18] sm:$0xff]
    %v726 = vld [vmem:[#allocation8 + $0x20] sm:$0xff]
    %v727 = vld [vmem:[#allocation8 + $0x28] sm:$0xff]
    %v728 = vld [vmem:[#allocation8 + $0x30] sm:$0xff]
    %v729 = vld [vmem:[#allocation8 + $0x38] sm:$0xff]
    %v730 = vld [vmem:[#allocation8 + $0x40] sm:$0xff]
    %v731 = vld [vmem:[#allocation8 + $0x48] sm:$0xff]
    %v732 = vld [vmem:[#allocation8 + $0x50] sm:$0xff]
    %v733 = vld [vmem:[#allocation8 + $0x58] sm:$0xff]
    %v734 = vld [vmem:[#allocation8 + $0x60] sm:$0xff]
    %v735 = vld [vmem:[#allocation8 + $0x68] sm:$0xff]
    %v736 = vld [vmem:[#allocation8 + $0x70] sm:$0xff]
    %v737 = vld [vmem:[#allocation8 + $0x78] sm:$0xff]
    %v738 = vld [vmem:[#allocation8 + $0x80] sm:$0xff]
    %v739 = vld [vmem:[#allocation8 + $0x88] sm:$0xff]
    %v740 = vld [vmem:[#allocation8 + $0x90] sm:$0xff]
    %v741 = vld [vmem:[#allocation8 + $0x98] sm:$0xff]
    %v742 = vld [vmem:[#allocation8 + $0xa0] sm:$0xff]
    %v743 = vld [vmem:[#allocation8 + $0xa8] sm:$0xff]
    %v744 = vld [vmem:[#allocation8 + $0xb0] sm:$0xff]
    %v745 = vld [vmem:[#allocation8 + $0xb8] sm:$0xff]
    %v746 = vld [vmem:[#allocation8 + $0xc0] sm:$0xff]
    %v747 = vld [vmem:[#allocation8 + $0xc8] sm:$0xff]
    %v748 = vld [vmem:[#allocation8 + $0xd0] sm:$0xff]
    %v749 = vld [vmem:[#allocation8 + $0xd8] sm:$0xff]
    %v750 = vld [vmem:[#allocation8 + $0xe0] sm:$0xff]
    %v751 = vld [vmem:[#allocation8 + $0xe8] sm:$0xff]
    %v752 = vld [vmem:[#allocation8 + $0xf0] sm:$0xff]
    %v753 = vld [vmem:[#allocation8 + $0xf8] sm:$0xff]
    %v754 = vld [vmem:[#allocation8 + $0x100] sm:$0xff]
    %v755 = vld [vmem:[#allocation8 + $0x108] sm:$0xff]
    %v756 = vld [vmem:[#allocation8 + $0x110] sm:$0xff]
    %v757 = vld [vmem:[#allocation8 + $0x118] sm:$0xff]
    %v758 = vld [vmem:[#allocation8 + $0x120] sm:$0xff]
    %v759 = vld [vmem:[#allocation8 + $0x128] sm:$0xff]
    %v760 = vld [vmem:[#allocation8 + $0x130] sm:$0xff]
    %v761 = vld [vmem:[#allocation8 + $0x138] sm:$0xff]
    %v762 = vld [vmem:[#allocation8 + $0x140] sm:$0xff]
    %v763 = vld [vmem:[#allocation8 + $0x148] sm:$0xff]
    %v764 = vld [vmem:[#allocation8 + $0x150] sm:$0xff]
    %v765 = vld [vmem:[#allocation8 + $0x158] sm:$0xff]
    %v766 = vld [vmem:[#allocation8 + $0x160] sm:$0xff]
    %v767 = vld [vmem:[#allocation8 + $0x168] sm:$0xff]
    %v768 = vld [vmem:[#allocation8 + $0x170] sm:$0xff]
    %v769 = vld [vmem:[#allocation8 + $0x178] sm:$0xff]
    %v770 = vld [vmem:[#allocation10] sm:$0x7]
    %v772 = vlaneseq
    %v773 = vshrl.u32 %v772, 7
    %v774 = vsub.s32 0, %v773
    %v775 = vrot.slane %v770, %v774
    %v776 = vlaneseq
    %v777 = vshrl.u32 %v776, 7
    %v778 = vsub.s32 1, %v777
    %v779 = vrot.slane %v770, %v778
    %v780 = vlaneseq
    %v781 = vshrl.u32 %v780, 7
    %v782 = vsub.s32 2, %v781
    %v783 = vrot.slane %v770, %v782
    %787 = vmatprep.subr.mxu0 %v768
    %788 = vmatpush1.msra.mxu0 %v767
    %789 = vmatprep.subr.mxu0 %v765
    %790 = vmatpush1.msra.mxu0 %v764
    %791 = vmatprep.subr.mxu0 %v762
    %792 = vmatpush1.msra.mxu0 %v761
    %793 = vmatprep.subr.mxu0 %v759
    %794 = vmatpush1.msra.mxu0 %v758
    %795 = vmatprep.subr.mxu0 %v756
    %796 = vmatpush1.msra.mxu0 %v755
    %797 = vmatprep.subr.mxu0 %v753
    %798 = vmatpush1.msra.mxu0 %v752
    %799 = vmatprep.subr.mxu0 %v750
    %800 = vmatpush1.msra.mxu0 %v749
    %801 = vmatprep.subr.mxu0 %v747
    %802 = vmatpush1.msra.mxu0 %v746
    %803 = vmatprep.subr.mxu0 %v744
    %804 = vmatpush1.msra.mxu0 %v743
    %805 = vmatprep.subr.mxu0 %v741
    %806 = vmatpush1.msra.mxu0 %v740
    %807 = vmatprep.subr.mxu0 %v738
    %808 = vmatpush1.msra.mxu0 %v737
    %809 = vmatprep.subr.mxu0 %v735
    %810 = vmatpush1.msra.mxu0 %v734
    %811 = vmatprep.subr.mxu0 %v732
    %812 = vmatpush1.msra.mxu0 %v731
    %813 = vmatprep.subr.mxu0 %v729
    %814 = vmatpush1.msra.mxu0 %v728
    %815 = vmatprep.subr.mxu0 %v726
    %816 = vmatpush1.msra.mxu0 %v725
    %817 = vmatprep.subr.mxu0 %v723
    %818 = vmatpush1.msra.mxu0 %v722
    %819 = vmatprep.subr.mxu0 0.0
    %820 = vmatpush2.msra.mxu0 0.0
    %821 = vmatprep.subr.mxu0 0.0
    %822 = vmatpush2.msra.mxu0 0.0
    %823 = vmatprep.subr.mxu0 0.0
    %824 = vmatpush2.msra.mxu0 0.0
    %825 = vmatprep.subr.mxu0 0.0
    %826 = vmatpush2.msra.mxu0 0.0
    %827 = vmatprep.subr.mxu0 0.0
    %828 = vmatpush2.msra.mxu0 0.0
    %829 = vmatprep.subr.mxu0 0.0
    %830 = vmatpush2.msra.mxu0 0.0
    %831 = vmatprep.subr.mxu0 0.0
    %832 = vmatpush2.msra.mxu0 0.0
    %833 = vmatprep.subr.mxu0 0.0
    %834 = vmatpush2.msra.mxu0 0.0
    %835 = vmatprep.subr.mxu0 0.0
    %836 = vmatpush2.msra.mxu0 0.0
    %837 = vmatprep.subr.mxu0 0.0
    %838 = vmatpush2.msra.mxu0 0.0
    %839 = vmatprep.subr.mxu0 0.0
    %840 = vmatpush2.msra.mxu0 0.0
    %841 = vmatprep.subr.mxu0 0.0
    %842 = vmatpush2.msra.mxu0 0.0
    %843 = vmatprep.subr.mxu0 0.0
    %844 = vmatpush2.msra.mxu0 0.0
    %845 = vmatprep.subr.mxu0 0.0
    %846 = vmatpush2.msra.mxu0 0.0
    %847 = vmatprep.subr.mxu0 0.0
    %848 = vmatpush2.msra.mxu0 0.0
    %849 = vmatprep.subr.mxu0 0.0
    %850 = vmatpush2.msra.mxu0 0.0
    %851 = vmatprep.mubr.f32.mxu0 0.0
    %852 = vmatmul.mubr.f32.gmra.mxu0 %v104
    %v853 = vpop.f32.mrf.mxu0
    %v854 = vadd.f32 %v775, %v853
    %v855 = vpop.f32.mrf.mxu0
    %v856 = vadd.f32 %v779, %v855
    %857 = vdwg.mxu0
    %858 = vmatprep.subr.mxu0 0.0
    %859 = vmatpush1.msra.mxu0 %v769
    %860 = vmatprep.subr.mxu0 0.0
    %861 = vmatpush1.msra.mxu0 %v766
    %862 = vmatprep.subr.mxu0 0.0
    %863 = vmatpush1.msra.mxu0 %v763
    %864 = vmatprep.subr.mxu0 0.0
    %865 = vmatpush1.msra.mxu0 %v760
    %866 = vmatprep.subr.mxu0 0.0
    %867 = vmatpush1.msra.mxu0 %v757
    %868 = vmatprep.subr.mxu0 0.0
    %869 = vmatpush1.msra.mxu0 %v754
    %870 = vmatprep.subr.mxu0 0.0
    %871 = vmatpush1.msra.mxu0 %v751
    %872 = vmatprep.subr.mxu0 0.0
    %873 = vmatpush1.msra.mxu0 %v748
    %874 = vmatprep.subr.mxu0 0.0
    %875 = vmatpush1.msra.mxu0 %v745
    %876 = vmatprep.subr.mxu0 0.0
    %877 = vmatpush1.msra.mxu0 %v742
    %878 = vmatprep.subr.mxu0 0.0
    %879 = vmatpush1.msra.mxu0 %v739
    %880 = vmatprep.subr.mxu0 0.0
    %881 = vmatpush1.msra.mxu0 %v736
    %882 = vmatprep.subr.mxu0 0.0
    %883 = vmatpush1.msra.mxu0 %v733
    %884 = vmatprep.subr.mxu0 0.0
    %885 = vmatpush1.msra.mxu0 %v730
    %886 = vmatprep.subr.mxu0 0.0
    %887 = vmatpush1.msra.mxu0 %v727
    %888 = vmatprep.subr.mxu0 0.0
    %889 = vmatpush1.msra.mxu0 %v724
    %890 = vmatprep.subr.mxu0 0.0
    %891 = vmatpush2.msra.mxu0 0.0
    %892 = vmatprep.subr.mxu0 0.0
    %893 = vmatpush2.msra.mxu0 0.0
    %894 = vmatprep.subr.mxu0 0.0
    %895 = vmatpush2.msra.mxu0 0.0
    %896 = vmatprep.subr.mxu0 0.0
    %897 = vmatpush2.msra.mxu0 0.0
    %898 = vmatprep.subr.mxu0 0.0
    %899 = vmatpush2.msra.mxu0 0.0
    %900 = vmatprep.subr.mxu0 0.0
    %901 = vmatpush2.msra.mxu0 0.0
    %902 = vmatprep.subr.mxu0 0.0
    %903 = vmatpush2.msra.mxu0 0.0
    %904 = vmatprep.subr.mxu0 0.0
    %905 = vmatpush2.msra.mxu0 0.0
    %906 = vmatprep.subr.mxu0 0.0
    %907 = vmatpush2.msra.mxu0 0.0
    %908 = vmatprep.subr.mxu0 0.0
    %909 = vmatpush2.msra.mxu0 0.0
    %910 = vmatprep.subr.mxu0 0.0
    %911 = vmatpush2.msra.mxu0 0.0
    %912 = vmatprep.subr.mxu0 0.0
    %913 = vmatpush2.msra.mxu0 0.0
    %914 = vmatprep.subr.mxu0 0.0
    %915 = vmatpush2.msra.mxu0 0.0
    %916 = vmatprep.subr.mxu0 0.0
    %917 = vmatpush2.msra.mxu0 0.0
    %918 = vmatprep.subr.mxu0 0.0
    %919 = vmatpush2.msra.mxu0 0.0
    %920 = vmatprep.subr.mxu0 0.0
    %921 = vmatpush2.msra.mxu0 0.0
    %922 = vmatprep.mubr.f32.mxu0 0.0
    %923 = vmatmul.mubr.f32.gmra.mxu0 %v104
    %v924 = vpop.f32.mrf.mxu0
    %v925 = vadd.f32 %v783, %v924
    %v926 = vpop.f32.mrf.mxu0
    %927 = vdwg.mxu0
    %v928 = vadd.f32 %v719, %v854
    %v929 = vxor.u32 %v928, 2147483648
    %v930 = vmul.f32 %v929, 1.442695
    %v931 = vpow.pop %v930
    %v932 = vadd.f32 %v931, 1.0
    %v933 = vrcp.pop %v932
    %v934 = vmul.f32 1.0, %v933
    %v935 = vadd.f32 %v720, %v856
    %v936 = vxor.u32 %v935, 2147483648
    %v937 = vmul.f32 %v936, 1.442695
    %v938 = vpow.pop %v937
    %v939 = vadd.f32 %v938, 1.0
    %v940 = vrcp.pop %v939
    %v941 = vmul.f32 1.0, %v940
    %v942 = vmul.f32 %v934, %v925
    %v943 = vadd.f32 %v721, %v942
    %v944 = vtanh.pop %v943
    %v945 = vsub.f32 1.0, %v941
    %v946 = vmul.f32 %v945, %v944
    %v947 = vmul.f32 %v941, %v104
    %v948 = vadd.f32 %v946, %v947
    %949 = vst [vmem:[%s11] sm:$0x3] %v948
    %v950 = vpack.c.bf16 %v948, %v948
    %951 = vst [vmem:[%s12] sm:$0x1] %v950
    %v952 = vpack.c.bf16 %v345, %v345
    %v953 = vpack.c.bf16 %v351, %v351
    %v957 = vunpack.c.l.s4 1966171168
    %v958 = vunpack.c.0.s8 %v957
    %v959 = vlaneseq
    %v960 = vshrl.u32 %v959, 7
    %v961 = vsub.s32 %v958, %v960
    %v962 = vrot.slane %v952, %v961
    %v964 = vunpack.c.l.s4 1966171168
    %v965 = vunpack.c.0.s8 %v964
    %v966 = vlaneseq
    %v967 = vshrl.u32 %v966, 7
    %v968 = vsub.s32 %v965, %v967
    %v969 = vrot.slane %v962, %v968
    %v971 = vunpack.c.l.s4 1966171168
    %v972 = vunpack.c.0.s8 %v971
    %v973 = vlaneseq
    %v974 = vshrl.u32 %v973, 7
    %v975 = vsub.s32 %v972, %v974
    %v976 = vrot.slane %v953, %v975
    %v978 = vunpack.c.l.s4 1966171168
    %v979 = vunpack.c.0.s8 %v978
    %v980 = vlaneseq
    %v981 = vshrl.u32 %v980, 7
    %v982 = vsub.s32 %v979, %v981
    %v983 = vrot.slane %v976, %v982
    %v985 = vunpack.c.l.s4 1935823168
    %v986 = vunpack.c.0.s8 %v985
    %v987 = vlaneseq
    %v988 = vshrl.u32 %v987, 7
    %v989 = vsub.s32 %v986, %v988
    %v990 = vrot.slane %v969, %v989
    %v992 = vunpack.c.l.s4 1935823168
    %v993 = vunpack.c.0.s8 %v992
    %v994 = vlaneseq
    %v995 = vshrl.u32 %v994, 7
    %v996 = vsub.s32 %v993, %v995
    %v997 = vrot.slane %v990, %v996
    %v999 = vunpack.c.l.s4 1935823168
    %v1000 = vunpack.c.0.s8 %v999
    %v1001 = vlaneseq
    %v1002 = vshrl.u32 %v1001, 7
    %v1003 = vsub.s32 %v1000, %v1002
    %v1004 = vrot.slane %v983, %v1003
    %v1006 = vunpack.c.l.s4 1935823168
    %v1007 = vunpack.c.0.s8 %v1006
    %v1008 = vlaneseq
    %v1009 = vshrl.u32 %v1008, 7
    %v1010 = vsub.s32 %v1007, %v1009
    %v1011 = vrot.slane %v1004, %v1010
    %v1012 = vunpack.c.l.b16 %v997
    %v1013 = vunpack.c.l.b16 %v1011
    %v1014 = vrot.slane %v1013, 7
    %v1015 = vsel %vm258, %v1014, %v1012
    %v1016 = vpack.c.b16 %v1015, %v1015
    %v1018 = vunpack.c.l.s4 1966171168
    %v1019 = vunpack.c.0.s8 %v1018
    %v1020 = vlaneseq
    %v1021 = vshrl.u32 %v1020, 7
    %v1022 = vsub.s32 %v1019, %v1021
    %v1023 = vrot.slane %v1016, %v1022
    %v1025 = vunpack.c.l.s4 1966171168
    %v1026 = vunpack.c.0.s8 %v1025
    %v1027 = vlaneseq
    %v1028 = vshrl.u32 %v1027, 7
    %v1029 = vsub.s32 %v1026, %v1028
    %v1030 = vrot.slane %v1023, %v1029
    %1032 = vst [vmem:[%s12 + $0x1] sm:$0x1] %v1030
    // Predicated region
    $region66: #{decoder_forward.2} parent=1 // pred_check
      _
    $region67: #{decoder_forward.2} parent=1 // pred_check_branch
      %1034 = sbr.rel (0) target = $region69
    $region68: #{decoder_forward.2} parent=1 // pred_region
      _
    $region69: #{decoder_forward.2} parent=1 // pred_fallthru
      _
    // Predicated region
    $region70: #{decoder_forward.2} parent=1 // pred_check
      _
    $region71: #{decoder_forward.2} parent=1 // pred_check_branch
      %1036 = sbr.rel (0) target = $region73
    $region72: #{decoder_forward.2} parent=1 // pred_region
      _
    $region73: #{decoder_forward.2} parent=1 // pred_fallthru
      _
    // Predicated region
    $region74: #{decoder_forward.2} parent=1 // pred_check
      _
    $region75: #{decoder_forward.2} parent=1 // pred_check_branch
      %1038 = sbr.rel (0) target = $region77
    $region76: #{decoder_forward.2} parent=1 // pred_region
      %s1040 = ssub.s32 32, 32
      %1041 = vsyncadd [#allocation4], %s1040
      %s1043 = sshll.u32 [#allocation11], 4
      %s1044 = int_to_ptr.vmem [resolvable:$true] %s1043
      %1046 = dma.vmem_to_hbm [thread:$0]  %s1044, 32, %s13, [#allocation4]
    $region77: #{decoder_forward.2} parent=1 // pred_fallthru
      _
    // Predicated region
    $region78: #{decoder_forward.2} parent=1 // pred_check
      _
    $region79: #{decoder_forward.2} parent=1 // pred_check_branch
      %1048 = sbr.rel (0) target = $region81
    $region80: #{decoder_forward.2} parent=1 // pred_region
      _
    $region81: #{decoder_forward.2} parent=1 // pred_fallthru
      _
    // Predicated region
    $region82: #{decoder_forward.2} parent=1 // pred_check
      _
    $region83: #{decoder_forward.2} parent=1 // pred_check_branch
      %1050 = sbr.rel (0) target = $region85
    $region84: #{decoder_forward.2} parent=1 // pred_region
      _
    $region85: #{decoder_forward.2} parent=1 // pred_fallthru
      _
    // Predicated region
    $region86: #{decoder_forward.2} parent=1 // pred_check
      _
    $region87: #{decoder_forward.2} parent=1 // pred_check_branch
      %1052 = sbr.rel (0) target = $region89
    $region88: #{decoder_forward.2} parent=1 // pred_region
      %1053 = dma.done [#allocation4], 32
    $region89: #{decoder_forward.2} parent=1 // pred_fallthru
      _
    %1054 = vsyncpa [#allocation3], 1
    %1055 = vsyncpa [#allocation6], 1
    %1056 = vsyncpa [#allocation9], 1
    %1057 = vsyncpa [#allocation4], 1

</llo_original>
